<compile_context>
chip_gen: v5e
topology: v5e:2x2
jax: 0.10.0
libtpu: 0.0.40
codegen_flags: <defaults>
</compile_context>

<pallas_src>
import functools

import jax
import jax.numpy as jnp
from jax.experimental import pallas as pl
from jax.experimental.pallas import tpu as pltpu

_LANE = 128


def _round_up(x, m):
    return ((x + m - 1) // m) * m


# ----------------------------------------------------------------------------
# Pallas kernel: fused matmul + bias + (optional) LeakyReLU, single grid step.
# Operands arrive lane-padded (K, Cout multiples of 128) and in bf16; accumulate
# / bias / activation in f32 over the whole (M, Cp) tile.
# ----------------------------------------------------------------------------
def _mm_bias_act_kernel(x_ref, w_ref, b_ref, o_ref, *, apply_lrelu, neg_slope):
    acc = jnp.dot(x_ref[...], w_ref[...], preferred_element_type=jnp.float32)
    acc = acc + b_ref[...]                       # (1, Cp) broadcast over rows
    if apply_lrelu:
        acc = jnp.where(acc > 0, acc, acc * neg_slope)
    o_ref[...] = acc.astype(o_ref.dtype)


def _matmul_bias_act(patches, w2, bias, *, apply_lrelu, neg_slope=0.01):
    """patches: (M, K), w2: (K, Cout), bias: (1, Cout) -> (M, Cout) float32."""
    M, K = patches.shape
    Cout = w2.shape[1]
    Kp = _round_up(K, _LANE)
    Cp = _round_up(Cout, _LANE)

    # Lane-dense bf16 operands (zero-padding does not change the result).
    x_p = jnp.pad(patches, ((0, 0), (0, Kp - K))).astype(jnp.bfloat16)
    w_p = jnp.pad(w2, ((0, Kp - K), (0, Cp - Cout))).astype(jnp.bfloat16)
    b_p = jnp.pad(bias, ((0, 0), (0, Cp - Cout))).astype(jnp.float32)

    kernel = functools.partial(
        _mm_bias_act_kernel, apply_lrelu=apply_lrelu, neg_slope=neg_slope
    )
    out = pl.pallas_call(
        kernel,
        out_shape=jax.ShapeDtypeStruct((M, Cp), jnp.float32),
        grid=(1,),
        in_specs=[
            pl.BlockSpec((M, Kp), lambda i: (0, 0)),   # whole-M tile
            pl.BlockSpec((Kp, Cp), lambda i: (0, 0)),  # resident weights
            pl.BlockSpec((1, Cp), lambda i: (0, 0)),   # resident bias
        ],
        out_specs=pl.BlockSpec((M, Cp), lambda i: (0, 0)),  # lane-dense store
        compiler_params=pltpu.CompilerParams(
            dimension_semantics=("arbitrary",)),
    )(x_p, w_p, b_p)
    return out[:, :Cout]


# ----------------------------------------------------------------------------
# Conv3d (channels-last in / channels-last out) = im2col + fused Pallas matmul
# ----------------------------------------------------------------------------
def conv3d_cl(x_cl, w, b, *, stride, padding, lrelu, neg_slope=0.01):
    """x_cl: (N, D, H, W, Cin) channels-last; w: (Cout, Cin, k, k, k);
    b: (Cout,) or None.  Returns (N, Do, Ho, Wo, Cout) channels-last."""
    N, D, H, W_, Cin = x_cl.shape
    Cout, Cin2, kd, kh, kw = w.shape
    assert Cin == Cin2 and kd == kh == kw
    k = kd
    Do = (D + 2 * padding - k) // stride + 1
    Ho = (H + 2 * padding - k) // stride + 1
    Wo = (W_ + 2 * padding - k) // stride + 1

    p = padding
    xp = jnp.pad(x_cl, ((0, 0), (p, p), (p, p), (p, p), (0, 0)))

    # TODO(synk): fold the im2col gather (and ideally all four layers) into a
    # single VMEM-resident pallas_call; kept as XLA glue (fused under jit) here.
    cols = []
    for a in range(k):
        for c in range(k):
            for e in range(k):
                cols.append(
                    xp[:, a:a + stride * Do:stride,
                          c:c + stride * Ho:stride,
                          e:e + stride * Wo:stride, :]
                )
    # (N, Do, Ho, Wo, Cin, k^3) -> (M, K) with K ordered (Cin, kd, kh, kw),
    # matching w.reshape(Cout, K).
    patches = jnp.stack(cols, axis=-1)
    M = N * Do * Ho * Wo
    K = Cin * k * k * k
    patches = patches.reshape(M, K).astype(jnp.float32)

    w2 = w.reshape(Cout, K).T.astype(jnp.float32)            # (K, Cout)
    bias = (b if b is not None else jnp.zeros((Cout,), jnp.float32)).reshape(1, Cout)

    out = _matmul_bias_act(patches, w2, bias, apply_lrelu=lrelu, neg_slope=neg_slope)
    return out.reshape(N, Do, Ho, Wo, Cout)                  # stays channels-last


# ----------------------------------------------------------------------------
# Parameter construction (deterministic, synthetic)
# ----------------------------------------------------------------------------
def init_conv3d(key, cout, cin, k, with_bias=True):
    kw_, kb_ = jax.random.split(key)
    fan_in = cin * k * k * k
    w = jax.random.normal(kw_, (cout, cin, k, k, k), jnp.float32) / jnp.sqrt(float(fan_in))
    b = (jax.random.normal(kb_, (cout,), jnp.float32) * 0.01) if with_bias else None
    return w, b


def make_params(key, image_size=16, conv_dim=4, c_dim=3, repeat_num=2):
    keys = jax.random.split(key, repeat_num + 2)
    main = []
    w, b = init_conv3d(keys[0], conv_dim, 1, 4, with_bias=True)
    main.append((w, b))
    curr_dim = conv_dim
    for i in range(1, repeat_num):
        w, b = init_conv3d(keys[i], curr_dim * 2, curr_dim, 4, with_bias=True)
        main.append((w, b))
        curr_dim = curr_dim * 2
    ksz = image_size // (2 ** repeat_num)
    conv1_w, _ = init_conv3d(keys[repeat_num], 1, curr_dim, 3, with_bias=False)
    conv2_w, _ = init_conv3d(keys[repeat_num + 1], c_dim, curr_dim, ksz, with_bias=False)
    return {"main": main, "conv1_w": conv1_w, "conv2_w": conv2_w}


# ----------------------------------------------------------------------------
# Forward pass (matches Discriminator_DC.forward)
# ----------------------------------------------------------------------------
@jax.jit
def discriminator_dc_forward(x, params):
    # NCDHW -> channels-last once at entry.
    h = jnp.transpose(x, (0, 2, 3, 4, 1))
    for (w, b) in params["main"]:
        h = conv3d_cl(h, w, b, stride=2, padding=1, lrelu=True, neg_slope=0.01)
    out_src = conv3d_cl(h, params["conv1_w"], None, stride=1, padding=1, lrelu=False)
    out_src = jnp.transpose(out_src, (0, 4, 1, 2, 3))        # back to NCDHW
    out_cls = conv3d_cl(h, params["conv2_w"], None, stride=1, padding=0, lrelu=False)
    out_cls = out_cls.reshape(out_cls.shape[0], -1)          # spatial is 1x1x1 -> (N, c_dim)
    return out_src, out_cls


if __name__ == "__main__":
    # Small config consistent with the module: image_size=16, conv_dim=4,
    # c_dim=3, repeat_num=2  ->  final kernel_size = 16 / 2^2 = 4.
    image_size, conv_dim, c_dim, repeat_num = 16, 4, 3, 2

    key = jax.random.PRNGKey(0)
    kx, kp = jax.random.split(key)
    x = jax.random.normal(kx, (2, 1, image_size, image_size, image_size), jnp.float32)
    params = make_params(kp, image_size, conv_dim, c_dim, repeat_num)

    out_src, out_cls = discriminator_dc_forward(x, params)
    jax.block_until_ready(out_src)
    jax.block_until_ready(out_cls)

    assert out_src.shape == (2, 1, 4, 4, 4), out_src.shape
    assert out_cls.shape == (2, c_dim), out_cls.shape
    print("KERNEL_OK")
</pallas_src>

<mosaic_0001>
module attributes {stable_mosaic.version = 11 : i64} {
  func.func @_mm_bias_act_kernel(%arg0: i32, %arg1: memref<1024x128xbf16, #tpu.memory_space<vmem>>, %arg2: memref<128x128xbf16, #tpu.memory_space<vmem>>, %arg3: memref<1x128xf32, #tpu.memory_space<vmem>>, %arg4: memref<1024x128xf32, #tpu.memory_space<vmem>>) attributes {dimension_semantics = [#tpu.dimension_semantics<arbitrary>], iteration_bounds = array<i64: 1>, scalar_prefetch = 0 : i64, scratch_operands = 0 : i64, tpu.core_type = #tpu.core_type<tc>, window_params = [{pipeline_mode = #tpu.pipeline_mode<synchronous>, transform_indices = @transform_0, window_bounds = array<i64: 1024, 128>}, {pipeline_mode = #tpu.pipeline_mode<synchronous>, transform_indices = @transform_1, window_bounds = array<i64: 128, 128>}, {pipeline_mode = #tpu.pipeline_mode<synchronous>, transform_indices = @transform_2, window_bounds = array<i64: 1, 128>}, {pipeline_mode = #tpu.pipeline_mode<synchronous>, transform_indices = @transform_3, window_bounds = array<i64: 1024, 128>}]} {
    %c0 = arith.constant 0 : index
    %c0_0 = arith.constant 0 : index
    %0 = vector.load %arg1[%c0, %c0_0] : memref<1024x128xbf16, #tpu.memory_space<vmem>>, vector<1024x128xbf16>
    %c0_1 = arith.constant 0 : index
    %c0_2 = arith.constant 0 : index
    %1 = vector.load %arg2[%c0_1, %c0_2] : memref<128x128xbf16, #tpu.memory_space<vmem>>, vector<128x128xbf16>
    %cst = arith.constant dense<0.000000e+00> : vector<1024x128xf32>
    %2 = tpu.matmul %0, %1, %cst {dimension_numbers = #tpu.dot_dimension_numbers<[1], [0], [0], [1], [0, 0, 1, 1], [], []>} : vector<1024x128xbf16>, vector<128x128xbf16>, vector<1024x128xf32> -> vector<1024x128xf32>
    %c0_3 = arith.constant 0 : index
    %c0_4 = arith.constant 0 : index
    %3 = vector.load %arg3[%c0_3, %c0_4] : memref<1x128xf32, #tpu.memory_space<vmem>>, vector<1x128xf32>
    %4 = vector.broadcast %3 : vector<1x128xf32> to vector<1024x128xf32>
    %5 = arith.addf %2, %4 : vector<1024x128xf32>
    %cst_5 = arith.constant 0.000000e+00 : f32
    %6 = vector.broadcast %cst_5 : f32 to vector<1024x128xf32>
    %7 = arith.cmpf ogt, %5, %6 : vector<1024x128xf32>
    %cst_6 = arith.constant 0.00999999977 : f32
    %8 = vector.broadcast %cst_6 : f32 to vector<1024x128xf32>
    %9 = arith.mulf %5, %8 : vector<1024x128xf32>
    %10 = arith.select %7, %5, %9 : vector<1024x128xi1>, vector<1024x128xf32>
    %c0_7 = arith.constant 0 : index
    %c0_8 = arith.constant 0 : index
    %11 = vector.load %arg4[%c0_7, %c0_8] : memref<1024x128xf32, #tpu.memory_space<vmem>>, vector<1024x128xf32>
    tpu.vector_store %arg4[%c0_7, %c0_8], %10 {strides = array<i32>} : memref<1024x128xf32, #tpu.memory_space<vmem>>, vector<1024x128xf32>,
    return
  }
  func.func @transform_0(%arg0: i32) -> (i32, i32) {
    %c0_i32 = arith.constant 0 : i32
    %c0_i32_0 = arith.constant 0 : i32
    %c0_i32_1 = arith.constant 0 : i32
    return %c0_i32, %c0_i32_0 : i32, i32
  }
  func.func @transform_1(%arg0: i32) -> (i32, i32) {
    %c0_i32 = arith.constant 0 : i32
    %c0_i32_0 = arith.constant 0 : i32
    %c0_i32_1 = arith.constant 0 : i32
    return %c0_i32, %c0_i32_0 : i32, i32
  }
  func.func @transform_2(%arg0: i32) -> (i32, i32) {
    %c0_i32 = arith.constant 0 : i32
    %c0_i32_0 = arith.constant 0 : i32
    %c0_i32_1 = arith.constant 0 : i32
    return %c0_i32, %c0_i32_0 : i32, i32
  }
  func.func @transform_3(%arg0: i32) -> (i32, i32) {
    %c0_i32 = arith.constant 0 : i32
    %c0_i32_0 = arith.constant 0 : i32
    %c0_i32_1 = arith.constant 0 : i32
    return %c0_i32, %c0_i32_0 : i32, i32
  }
}

module attributes {stable_mosaic.version = 11 : i64} {
  func.func @_mm_bias_act_kernel(%arg0: i32, %arg1: memref<128x256xbf16, #tpu.memory_space<vmem>>, %arg2: memref<256x128xbf16, #tpu.memory_space<vmem>>, %arg3: memref<1x128xf32, #tpu.memory_space<vmem>>, %arg4: memref<128x128xf32, #tpu.memory_space<vmem>>) attributes {dimension_semantics = [#tpu.dimension_semantics<arbitrary>], iteration_bounds = array<i64: 1>, scalar_prefetch = 0 : i64, scratch_operands = 0 : i64, tpu.core_type = #tpu.core_type<tc>, window_params = [{pipeline_mode = #tpu.pipeline_mode<synchronous>, transform_indices = @transform_0, window_bounds = array<i64: 128, 256>}, {pipeline_mode = #tpu.pipeline_mode<synchronous>, transform_indices = @transform_1, window_bounds = array<i64: 256, 128>}, {pipeline_mode = #tpu.pipeline_mode<synchronous>, transform_indices = @transform_2, window_bounds = array<i64: 1, 128>}, {pipeline_mode = #tpu.pipeline_mode<synchronous>, transform_indices = @transform_3, window_bounds = array<i64: 128, 128>}]} {
    %c0 = arith.constant 0 : index
    %c0_0 = arith.constant 0 : index
    %0 = vector.load %arg1[%c0, %c0_0] : memref<128x256xbf16, #tpu.memory_space<vmem>>, vector<128x256xbf16>
    %c0_1 = arith.constant 0 : index
    %c0_2 = arith.constant 0 : index
    %1 = vector.load %arg2[%c0_1, %c0_2] : memref<256x128xbf16, #tpu.memory_space<vmem>>, vector<256x128xbf16>
    %cst = arith.constant dense<0.000000e+00> : vector<128x128xf32>
    %2 = tpu.matmul %0, %1, %cst {dimension_numbers = #tpu.dot_dimension_numbers<[1], [0], [0], [1], [0, 0, 1, 1], [], []>} : vector<128x256xbf16>, vector<256x128xbf16>, vector<128x128xf32> -> vector<128x128xf32>
    %c0_3 = arith.constant 0 : index
    %c0_4 = arith.constant 0 : index
    %3 = vector.load %arg3[%c0_3, %c0_4] : memref<1x128xf32, #tpu.memory_space<vmem>>, vector<1x128xf32>
    %4 = vector.broadcast %3 : vector<1x128xf32> to vector<128x128xf32>
    %5 = arith.addf %2, %4 : vector<128x128xf32>
    %cst_5 = arith.constant 0.000000e+00 : f32
    %6 = vector.broadcast %cst_5 : f32 to vector<128x128xf32>
    %7 = arith.cmpf ogt, %5, %6 : vector<128x128xf32>
    %cst_6 = arith.constant 0.00999999977 : f32
    %8 = vector.broadcast %cst_6 : f32 to vector<128x128xf32>
    %9 = arith.mulf %5, %8 : vector<128x128xf32>
    %10 = arith.select %7, %5, %9 : vector<128x128xi1>, vector<128x128xf32>
    %c0_7 = arith.constant 0 : index
    %c0_8 = arith.constant 0 : index
    %11 = vector.load %arg4[%c0_7, %c0_8] : memref<128x128xf32, #tpu.memory_space<vmem>>, vector<128x128xf32>
    tpu.vector_store %arg4[%c0_7, %c0_8], %10 {strides = array<i32>} : memref<128x128xf32, #tpu.memory_space<vmem>>, vector<128x128xf32>,
    return
  }
  func.func @transform_0(%arg0: i32) -> (i32, i32) {
    %c0_i32 = arith.constant 0 : i32
    %c0_i32_0 = arith.constant 0 : i32
    %c0_i32_1 = arith.constant 0 : i32
    return %c0_i32, %c0_i32_0 : i32, i32
  }
  func.func @transform_1(%arg0: i32) -> (i32, i32) {
    %c0_i32 = arith.constant 0 : i32
    %c0_i32_0 = arith.constant 0 : i32
    %c0_i32_1 = arith.constant 0 : i32
    return %c0_i32, %c0_i32_0 : i32, i32
  }
  func.func @transform_2(%arg0: i32) -> (i32, i32) {
    %c0_i32 = arith.constant 0 : i32
    %c0_i32_0 = arith.constant 0 : i32
    %c0_i32_1 = arith.constant 0 : i32
    return %c0_i32, %c0_i32_0 : i32, i32
  }
  func.func @transform_3(%arg0: i32) -> (i32, i32) {
    %c0_i32 = arith.constant 0 : i32
    %c0_i32_0 = arith.constant 0 : i32
    %c0_i32_1 = arith.constant 0 : i32
    return %c0_i32, %c0_i32_0 : i32, i32
  }
}

module attributes {stable_mosaic.version = 11 : i64} {
  func.func @_mm_bias_act_kernel(%arg0: i32, %arg1: memref<2x512xbf16, #tpu.memory_space<vmem>>, %arg2: memref<512x128xbf16, #tpu.memory_space<vmem>>, %arg3: memref<1x128xf32, #tpu.memory_space<vmem>>, %arg4: memref<2x128xf32, #tpu.memory_space<vmem>>) attributes {dimension_semantics = [#tpu.dimension_semantics<arbitrary>], iteration_bounds = array<i64: 1>, scalar_prefetch = 0 : i64, scratch_operands = 0 : i64, tpu.core_type = #tpu.core_type<tc>, window_params = [{pipeline_mode = #tpu.pipeline_mode<synchronous>, transform_indices = @transform_0, window_bounds = array<i64: 2, 512>}, {pipeline_mode = #tpu.pipeline_mode<synchronous>, transform_indices = @transform_1, window_bounds = array<i64: 512, 128>}, {pipeline_mode = #tpu.pipeline_mode<synchronous>, transform_indices = @transform_2, window_bounds = array<i64: 1, 128>}, {pipeline_mode = #tpu.pipeline_mode<synchronous>, transform_indices = @transform_3, window_bounds = array<i64: 2, 128>}]} {
    %c0 = arith.constant 0 : index
    %c0_0 = arith.constant 0 : index
    %0 = vector.load %arg1[%c0, %c0_0] : memref<2x512xbf16, #tpu.memory_space<vmem>>, vector<2x512xbf16>
    %c0_1 = arith.constant 0 : index
    %c0_2 = arith.constant 0 : index
    %1 = vector.load %arg2[%c0_1, %c0_2] : memref<512x128xbf16, #tpu.memory_space<vmem>>, vector<512x128xbf16>
    %cst = arith.constant dense<0.000000e+00> : vector<2x128xf32>
    %2 = tpu.matmul %0, %1, %cst {dimension_numbers = #tpu.dot_dimension_numbers<[1], [0], [0], [1], [0, 0, 1, 1], [], []>} : vector<2x512xbf16>, vector<512x128xbf16>, vector<2x128xf32> -> vector<2x128xf32>
    %c0_3 = arith.constant 0 : index
    %c0_4 = arith.constant 0 : index
    %3 = vector.load %arg3[%c0_3, %c0_4] : memref<1x128xf32, #tpu.memory_space<vmem>>, vector<1x128xf32>
    %4 = vector.broadcast %3 : vector<1x128xf32> to vector<2x128xf32>
    %5 = arith.addf %2, %4 : vector<2x128xf32>
    %c0_5 = arith.constant 0 : index
    %c0_6 = arith.constant 0 : index
    %6 = vector.load %arg4[%c0_5, %c0_6] : memref<2x128xf32, #tpu.memory_space<vmem>>, vector<2x128xf32>
    tpu.vector_store %arg4[%c0_5, %c0_6], %5 {strides = array<i32>} : memref<2x128xf32, #tpu.memory_space<vmem>>, vector<2x128xf32>,
    return
  }
  func.func @transform_0(%arg0: i32) -> (i32, i32) {
    %c0_i32 = arith.constant 0 : i32
    %c0_i32_0 = arith.constant 0 : i32
    %c0_i32_1 = arith.constant 0 : i32
    return %c0_i32, %c0_i32_0 : i32, i32
  }
  func.func @transform_1(%arg0: i32) -> (i32, i32) {
    %c0_i32 = arith.constant 0 : i32
    %c0_i32_0 = arith.constant 0 : i32
    %c0_i32_1 = arith.constant 0 : i32
    return %c0_i32, %c0_i32_0 : i32, i32
  }
  func.func @transform_2(%arg0: i32) -> (i32, i32) {
    %c0_i32 = arith.constant 0 : i32
    %c0_i32_0 = arith.constant 0 : i32
    %c0_i32_1 = arith.constant 0 : i32
    return %c0_i32, %c0_i32_0 : i32, i32
  }
  func.func @transform_3(%arg0: i32) -> (i32, i32) {
    %c0_i32 = arith.constant 0 : i32
    %c0_i32_0 = arith.constant 0 : i32
    %c0_i32_1 = arith.constant 0 : i32
    return %c0_i32, %c0_i32_0 : i32, i32
  }
}

module attributes {stable_mosaic.version = 11 : i64} {
  func.func @_mm_bias_act_kernel(%arg0: i32, %arg1: memref<128x256xbf16, #tpu.memory_space<vmem>>, %arg2: memref<256x128xbf16, #tpu.memory_space<vmem>>, %arg3: memref<1x128xf32, #tpu.memory_space<vmem>>, %arg4: memref<128x128xf32, #tpu.memory_space<vmem>>) attributes {dimension_semantics = [#tpu.dimension_semantics<arbitrary>], iteration_bounds = array<i64: 1>, scalar_prefetch = 0 : i64, scratch_operands = 0 : i64, tpu.core_type = #tpu.core_type<tc>, window_params = [{pipeline_mode = #tpu.pipeline_mode<synchronous>, transform_indices = @transform_0, window_bounds = array<i64: 128, 256>}, {pipeline_mode = #tpu.pipeline_mode<synchronous>, transform_indices = @transform_1, window_bounds = array<i64: 256, 128>}, {pipeline_mode = #tpu.pipeline_mode<synchronous>, transform_indices = @transform_2, window_bounds = array<i64: 1, 128>}, {pipeline_mode = #tpu.pipeline_mode<synchronous>, transform_indices = @transform_3, window_bounds = array<i64: 128, 128>}]} {
    %c0 = arith.constant 0 : index
    %c0_0 = arith.constant 0 : index
    %0 = vector.load %arg1[%c0, %c0_0] : memref<128x256xbf16, #tpu.memory_space<vmem>>, vector<128x256xbf16>
    %c0_1 = arith.constant 0 : index
    %c0_2 = arith.constant 0 : index
    %1 = vector.load %arg2[%c0_1, %c0_2] : memref<256x128xbf16, #tpu.memory_space<vmem>>, vector<256x128xbf16>
    %cst = arith.constant dense<0.000000e+00> : vector<128x128xf32>
    %2 = tpu.matmul %0, %1, %cst {dimension_numbers = #tpu.dot_dimension_numbers<[1], [0], [0], [1], [0, 0, 1, 1], [], []>} : vector<128x256xbf16>, vector<256x128xbf16>, vector<128x128xf32> -> vector<128x128xf32>
    %c0_3 = arith.constant 0 : index
    %c0_4 = arith.constant 0 : index
    %3 = vector.load %arg3[%c0_3, %c0_4] : memref<1x128xf32, #tpu.memory_space<vmem>>, vector<1x128xf32>
    %4 = vector.broadcast %3 : vector<1x128xf32> to vector<128x128xf32>
    %5 = arith.addf %2, %4 : vector<128x128xf32>
    %c0_5 = arith.constant 0 : index
    %c0_6 = arith.constant 0 : index
    %6 = vector.load %arg4[%c0_5, %c0_6] : memref<128x128xf32, #tpu.memory_space<vmem>>, vector<128x128xf32>
    tpu.vector_store %arg4[%c0_5, %c0_6], %5 {strides = array<i32>} : memref<128x128xf32, #tpu.memory_space<vmem>>, vector<128x128xf32>,
    return
  }
  func.func @transform_0(%arg0: i32) -> (i32, i32) {
    %c0_i32 = arith.constant 0 : i32
    %c0_i32_0 = arith.constant 0 : i32
    %c0_i32_1 = arith.constant 0 : i32
    return %c0_i32, %c0_i32_0 : i32, i32
  }
  func.func @transform_1(%arg0: i32) -> (i32, i32) {
    %c0_i32 = arith.constant 0 : i32
    %c0_i32_0 = arith.constant 0 : i32
    %c0_i32_1 = arith.constant 0 : i32
    return %c0_i32, %c0_i32_0 : i32, i32
  }
  func.func @transform_2(%arg0: i32) -> (i32, i32) {
    %c0_i32 = arith.constant 0 : i32
    %c0_i32_0 = arith.constant 0 : i32
    %c0_i32_1 = arith.constant 0 : i32
    return %c0_i32, %c0_i32_0 : i32, i32
  }
  func.func @transform_3(%arg0: i32) -> (i32, i32) {
    %c0_i32 = arith.constant 0 : i32
    %c0_i32_0 = arith.constant 0 : i32
    %c0_i32_1 = arith.constant 0 : i32
    return %c0_i32, %c0_i32_0 : i32, i32
  }
}

</mosaic_0001>

<llo_original>
// kernel: discriminator_dc_forward.4
$region0: #{discriminator_dc_forward.4}
  #allocation0 [shape = 'u32[]', space=smem, size = 0x4, offset = 0x4, fixed_abs, tag = 'smem constant byte address 0x4 - core index']
  #allocation1 [shape = 'u32[72,128]{1,0:T(1,128)}', space=vmem, size = 0x9000, scoped, tag = 'internal scratch']
  %s0 = inlined_call_operand.vmem [shape: bf16[1024,128], index: 0, kind: input, shape index: {}]
  %s1 = inlined_call_operand.vmem [shape: bf16[128,128], index: 1, kind: input, shape index: {}]
  %s2 = inlined_call_operand.vmem [shape: f32[1,128], index: 2, kind: input, shape index: {}]
  %s3 = inlined_call_operand.vmem [shape: f32[1024,128], index: 3, kind: output, shape index: {}]
  %s4 = sld [smem:[#allocation0]]
  $region22: #{discriminator_dc_forward.4} parent=0
    _
  %s6 = ssub.s32 1, %s4
  %s7 = scalar_select 0, %s6, %s4
  // Predicated region
  $region2: #{discriminator_dc_forward.4} parent=0 // pred_check
    _
  $region3: #{discriminator_dc_forward.4} parent=0 // pred_check_branch
    %9 = sbr.rel (0) target = $region5
  $region4: #{discriminator_dc_forward.4} parent=0 // pred_region
    _
  $region5: #{discriminator_dc_forward.4} parent=0 // pred_fallthru
    _
  // Predicated region
  $region6: #{discriminator_dc_forward.4} parent=0 // pred_check
    _
  $region7: #{discriminator_dc_forward.4} parent=0 // pred_check_branch
    %11 = sbr.rel (0) target = $region9
  $region8: #{discriminator_dc_forward.4} parent=0 // pred_region
    _
  $region9: #{discriminator_dc_forward.4} parent=0 // pred_fallthru
    _
  // Predicated region
  $region10: #{discriminator_dc_forward.4} parent=0 // pred_check
    _
  $region11: #{discriminator_dc_forward.4} parent=0 // pred_check_branch
    %13 = sbr.rel (0) target = $region13
  $region12: #{discriminator_dc_forward.4} parent=0 // pred_region
    _
  $region13: #{discriminator_dc_forward.4} parent=0 // pred_fallthru
    _
  %v14 = vld [vmem:[%s0] sm:$0xf]
  %v15 = vld [vmem:[%s0 + $0x4] sm:$0xf]
  %v16 = vld [vmem:[%s0 + $0x8] sm:$0xf]
  %v17 = vld [vmem:[%s0 + $0xc] sm:$0xf]
  %v18 = vld [vmem:[%s0 + $0x10] sm:$0xf]
  %v19 = vld [vmem:[%s0 + $0x14] sm:$0xf]
  %v20 = vld [vmem:[%s0 + $0x18] sm:$0xf]
  %v21 = vld [vmem:[%s0 + $0x1c] sm:$0xf]
  %v22 = vld [vmem:[%s0 + $0x20] sm:$0xf]
  %v23 = vld [vmem:[%s0 + $0x24] sm:$0xf]
  %v24 = vld [vmem:[%s0 + $0x28] sm:$0xf]
  %v25 = vld [vmem:[%s0 + $0x2c] sm:$0xf]
  %v26 = vld [vmem:[%s0 + $0x30] sm:$0xf]
  %v27 = vld [vmem:[%s0 + $0x34] sm:$0xf]
  %v28 = vld [vmem:[%s0 + $0x38] sm:$0xf]
  %v29 = vld [vmem:[%s0 + $0x3c] sm:$0xf]
  %v30 = vld [vmem:[%s0 + $0x40] sm:$0xf]
  %v31 = vld [vmem:[%s0 + $0x44] sm:$0xf]
  %v32 = vld [vmem:[%s0 + $0x48] sm:$0xf]
  %v33 = vld [vmem:[%s0 + $0x4c] sm:$0xf]
  %v34 = vld [vmem:[%s0 + $0x50] sm:$0xf]
  %v35 = vld [vmem:[%s0 + $0x54] sm:$0xf]
  %v36 = vld [vmem:[%s0 + $0x58] sm:$0xf]
  %v37 = vld [vmem:[%s0 + $0x5c] sm:$0xf]
  %v38 = vld [vmem:[%s0 + $0x60] sm:$0xf]
  %v39 = vld [vmem:[%s0 + $0x64] sm:$0xf]
  %v40 = vld [vmem:[%s0 + $0x68] sm:$0xf]
  %v41 = vld [vmem:[%s0 + $0x6c] sm:$0xf]
  %v42 = vld [vmem:[%s0 + $0x70] sm:$0xf]
  %v43 = vld [vmem:[%s0 + $0x74] sm:$0xf]
  %v44 = vld [vmem:[%s0 + $0x78] sm:$0xf]
  %v45 = vld [vmem:[%s0 + $0x7c] sm:$0xf]
  %v46 = vld [vmem:[%s0 + $0x80] sm:$0xf]
  %v47 = vld [vmem:[%s0 + $0x84] sm:$0xf]
  %v48 = vld [vmem:[%s0 + $0x88] sm:$0xf]
  %v49 = vld [vmem:[%s0 + $0x8c] sm:$0xf]
  %v50 = vld [vmem:[%s0 + $0x90] sm:$0xf]
  %v51 = vld [vmem:[%s0 + $0x94] sm:$0xf]
  %v52 = vld [vmem:[%s0 + $0x98] sm:$0xf]
  %v53 = vld [vmem:[%s0 + $0x9c] sm:$0xf]
  %v54 = vld [vmem:[%s0 + $0xa0] sm:$0xf]
  %v55 = vld [vmem:[%s0 + $0xa4] sm:$0xf]
  %v56 = vld [vmem:[%s0 + $0xa8] sm:$0xf]
  %v57 = vld [vmem:[%s0 + $0xac] sm:$0xf]
  %v58 = vld [vmem:[%s0 + $0xb0] sm:$0xf]
  %v59 = vld [vmem:[%s0 + $0xb4] sm:$0xf]
  %v60 = vld [vmem:[%s0 + $0xb8] sm:$0xf]
  %v61 = vld [vmem:[%s0 + $0xbc] sm:$0xf]
  %v62 = vld [vmem:[%s0 + $0xc0] sm:$0xf]
  %v63 = vld [vmem:[%s0 + $0xc4] sm:$0xf]
  %v64 = vld [vmem:[%s0 + $0xc8] sm:$0xf]
  %v65 = vld [vmem:[%s0 + $0xcc] sm:$0xf]
  %v66 = vld [vmem:[%s0 + $0xd0] sm:$0xf]
  %v67 = vld [vmem:[%s0 + $0xd4] sm:$0xf]
  %v68 = vld [vmem:[%s0 + $0xd8] sm:$0xf]
  %v69 = vld [vmem:[%s0 + $0xdc] sm:$0xf]
  %v70 = vld [vmem:[%s0 + $0xe0] sm:$0xf]
  %v71 = vld [vmem:[%s0 + $0xe4] sm:$0xf]
  %v72 = vld [vmem:[%s0 + $0xe8] sm:$0xf]
  %v73 = vld [vmem:[%s0 + $0xec] sm:$0xf]
  %v74 = vld [vmem:[%s0 + $0xf0] sm:$0xf]
  %v75 = vld [vmem:[%s0 + $0xf4] sm:$0xf]
  %v76 = vld [vmem:[%s0 + $0xf8] sm:$0xf]
  %v77 = vld [vmem:[%s0 + $0xfc] sm:$0xf]
  %v78 = vld [vmem:[%s0 + $0x100] sm:$0xf]
  %v79 = vld [vmem:[%s0 + $0x104] sm:$0xf]
  %v80 = vld [vmem:[%s0 + $0x108] sm:$0xf]
  %v81 = vld [vmem:[%s0 + $0x10c] sm:$0xf]
  %v82 = vld [vmem:[%s0 + $0x110] sm:$0xf]
  %v83 = vld [vmem:[%s0 + $0x114] sm:$0xf]
  %v84 = vld [vmem:[%s0 + $0x118] sm:$0xf]
  %v85 = vld [vmem:[%s0 + $0x11c] sm:$0xf]
  %v86 = vld [vmem:[%s0 + $0x120] sm:$0xf]
  %v87 = vld [vmem:[%s0 + $0x124] sm:$0xf]
  %v88 = vld [vmem:[%s0 + $0x128] sm:$0xf]
  %v89 = vld [vmem:[%s0 + $0x12c] sm:$0xf]
  %v90 = vld [vmem:[%s0 + $0x130] sm:$0xf]
  %v91 = vld [vmem:[%s0 + $0x134] sm:$0xf]
  %v92 = vld [vmem:[%s0 + $0x138] sm:$0xf]
  %v93 = vld [vmem:[%s0 + $0x13c] sm:$0xf]
  %v94 = vld [vmem:[%s0 + $0x140] sm:$0xf]
  %v95 = vld [vmem:[%s0 + $0x144] sm:$0xf]
  %v96 = vld [vmem:[%s0 + $0x148] sm:$0xf]
  %v97 = vld [vmem:[%s0 + $0x14c] sm:$0xf]
  %v98 = vld [vmem:[%s0 + $0x150] sm:$0xf]
  %v99 = vld [vmem:[%s0 + $0x154] sm:$0xf]
  %v100 = vld [vmem:[%s0 + $0x158] sm:$0xf]
  %v101 = vld [vmem:[%s0 + $0x15c] sm:$0xf]
  %v102 = vld [vmem:[%s0 + $0x160] sm:$0xf]
  %v103 = vld [vmem:[%s0 + $0x164] sm:$0xf]
  %v104 = vld [vmem:[%s0 + $0x168] sm:$0xf]
  %v105 = vld [vmem:[%s0 + $0x16c] sm:$0xf]
  %v106 = vld [vmem:[%s0 + $0x170] sm:$0xf]
  %v107 = vld [vmem:[%s0 + $0x174] sm:$0xf]
  %v108 = vld [vmem:[%s0 + $0x178] sm:$0xf]
  %v109 = vld [vmem:[%s0 + $0x17c] sm:$0xf]
  %v110 = vld [vmem:[%s0 + $0x180] sm:$0xf]
  %v111 = vld [vmem:[%s0 + $0x184] sm:$0xf]
  %v112 = vld [vmem:[%s0 + $0x188] sm:$0xf]
  %v113 = vld [vmem:[%s0 + $0x18c] sm:$0xf]
  %v114 = vld [vmem:[%s0 + $0x190] sm:$0xf]
  %v115 = vld [vmem:[%s0 + $0x194] sm:$0xf]
  %v116 = vld [vmem:[%s0 + $0x198] sm:$0xf]
  %v117 = vld [vmem:[%s0 + $0x19c] sm:$0xf]
  %v118 = vld [vmem:[%s0 + $0x1a0] sm:$0xf]
  %v119 = vld [vmem:[%s0 + $0x1a4] sm:$0xf]
  %v120 = vld [vmem:[%s0 + $0x1a8] sm:$0xf]
  %v121 = vld [vmem:[%s0 + $0x1ac] sm:$0xf]
  %v122 = vld [vmem:[%s0 + $0x1b0] sm:$0xf]
  %v123 = vld [vmem:[%s0 + $0x1b4] sm:$0xf]
  %v124 = vld [vmem:[%s0 + $0x1b8] sm:$0xf]
  %v125 = vld [vmem:[%s0 + $0x1bc] sm:$0xf]
  %v126 = vld [vmem:[%s0 + $0x1c0] sm:$0xf]
  %v127 = vld [vmem:[%s0 + $0x1c4] sm:$0xf]
  %v128 = vld [vmem:[%s0 + $0x1c8] sm:$0xf]
  %v129 = vld [vmem:[%s0 + $0x1cc] sm:$0xf]
  %v130 = vld [vmem:[%s0 + $0x1d0] sm:$0xf]
  %v131 = vld [vmem:[%s0 + $0x1d4] sm:$0xf]
  %v132 = vld [vmem:[%s0 + $0x1d8] sm:$0xf]
  %v133 = vld [vmem:[%s0 + $0x1dc] sm:$0xf]
  %v134 = vld [vmem:[%s0 + $0x1e0] sm:$0xf]
  %v135 = vld [vmem:[%s0 + $0x1e4] sm:$0xf]
  %v136 = vld [vmem:[%s0 + $0x1e8] sm:$0xf]
  %v137 = vld [vmem:[%s0 + $0x1ec] sm:$0xf]
  %v138 = vld [vmem:[%s0 + $0x1f0] sm:$0xf]
  %v139 = vld [vmem:[%s0 + $0x1f4] sm:$0xf]
  %v140 = vld [vmem:[%s0 + $0x1f8] sm:$0xf]
  %v141 = vld [vmem:[%s0 + $0x1fc] sm:$0xf]
  %v142 = vld [vmem:[%s1] sm:$0xf]
  %v143 = vld [vmem:[%s1 + $0x4] sm:$0xf]
  %v144 = vld [vmem:[%s1 + $0x8] sm:$0xf]
  %v145 = vld [vmem:[%s1 + $0xc] sm:$0xf]
  %v146 = vld [vmem:[%s1 + $0x10] sm:$0xf]
  %v147 = vld [vmem:[%s1 + $0x14] sm:$0xf]
  %v148 = vld [vmem:[%s1 + $0x18] sm:$0xf]
  %v149 = vld [vmem:[%s1 + $0x1c] sm:$0xf]
  %v150 = vld [vmem:[%s1 + $0x20] sm:$0xf]
  %v151 = vld [vmem:[%s1 + $0x24] sm:$0xf]
  %v152 = vld [vmem:[%s1 + $0x28] sm:$0xf]
  %v153 = vld [vmem:[%s1 + $0x2c] sm:$0xf]
  %v154 = vld [vmem:[%s1 + $0x30] sm:$0xf]
  %v155 = vld [vmem:[%s1 + $0x34] sm:$0xf]
  %v156 = vld [vmem:[%s1 + $0x38] sm:$0xf]
  %v157 = vld [vmem:[%s1 + $0x3c] sm:$0xf]
  %v158 = vld [vmem:[%s2] sm:$0x1]
  %v160 = vperm.slane %v158, 0
  %v290 = vunpack.c.l.b16 %v14
  %v291 = vunpack.c.l.b16 %v15
  %v292 = vunpack.c.l.b16 %v16
  %v293 = vunpack.c.l.b16 %v17
  %v294 = vunpack.c.l.b16 %v18
  %v295 = vunpack.c.l.b16 %v19
  %v296 = vunpack.c.l.b16 %v20
  %v297 = vunpack.c.l.b16 %v21
  %v298 = vunpack.c.l.b16 %v22
  %v299 = vunpack.c.l.b16 %v23
  %v300 = vunpack.c.l.b16 %v24
  %v301 = vunpack.c.l.b16 %v25
  %v302 = vunpack.c.l.b16 %v26
  %v303 = vunpack.c.l.b16 %v27
  %v304 = vunpack.c.l.b16 %v28
  %v305 = vunpack.c.l.b16 %v29
  %v306 = vunpack.c.l.b16 %v30
  %v307 = vunpack.c.l.b16 %v31
  %v308 = vunpack.c.l.b16 %v32
  %v309 = vunpack.c.l.b16 %v33
  %v310 = vunpack.c.l.b16 %v34
  %v311 = vunpack.c.l.b16 %v35
  %v312 = vunpack.c.l.b16 %v36
  %v313 = vunpack.c.l.b16 %v37
  %v314 = vunpack.c.l.b16 %v38
  %v315 = vunpack.c.l.b16 %v39
  %v316 = vunpack.c.l.b16 %v40
  %v317 = vunpack.c.l.b16 %v41
  %v318 = vunpack.c.l.b16 %v42
  %v319 = vunpack.c.l.b16 %v43
  %v320 = vunpack.c.l.b16 %v44
  %v321 = vunpack.c.l.b16 %v45
  %v322 = vunpack.c.l.b16 %v46
  %v323 = vunpack.c.l.b16 %v47
  %v324 = vunpack.c.l.b16 %v48
  %v325 = vunpack.c.l.b16 %v49
  %v326 = vunpack.c.l.b16 %v50
  %v327 = vunpack.c.l.b16 %v51
  %v328 = vunpack.c.l.b16 %v52
  %v329 = vunpack.c.l.b16 %v53
  %v330 = vunpack.c.l.b16 %v54
  %v331 = vunpack.c.l.b16 %v55
  %v332 = vunpack.c.l.b16 %v56
  %v333 = vunpack.c.l.b16 %v57
  %v334 = vunpack.c.l.b16 %v58
  %v335 = vunpack.c.l.b16 %v59
  %v336 = vunpack.c.l.b16 %v60
  %v337 = vunpack.c.l.b16 %v61
  %v338 = vunpack.c.l.b16 %v62
  %v339 = vunpack.c.l.b16 %v63
  %v340 = vunpack.c.l.b16 %v64
  %v341 = vunpack.c.l.b16 %v65
  %v342 = vunpack.c.l.b16 %v66
  %v343 = vunpack.c.l.b16 %v67
  %v344 = vunpack.c.l.b16 %v68
  %v345 = vunpack.c.l.b16 %v69
  %v346 = vunpack.c.l.b16 %v70
  %v347 = vunpack.c.l.b16 %v71
  %v348 = vunpack.c.l.b16 %v72
  %v349 = vunpack.c.l.b16 %v73
  %v350 = vunpack.c.l.b16 %v74
  %v351 = vunpack.c.l.b16 %v75
  %v352 = vunpack.c.l.b16 %v76
  %v353 = vunpack.c.l.b16 %v77
  %v354 = vunpack.c.l.b16 %v78
  %v355 = vunpack.c.l.b16 %v79
  %v356 = vunpack.c.l.b16 %v80
  %v357 = vunpack.c.l.b16 %v81
  %v358 = vunpack.c.l.b16 %v82
  %v359 = vunpack.c.l.b16 %v83
  %v360 = vunpack.c.l.b16 %v84
  %v361 = vunpack.c.l.b16 %v85
  %v362 = vunpack.c.l.b16 %v86
  %v363 = vunpack.c.l.b16 %v87
  %v364 = vunpack.c.l.b16 %v88
  %v365 = vunpack.c.l.b16 %v89
  %v366 = vunpack.c.l.b16 %v90
  %v367 = vunpack.c.l.b16 %v91
  %v368 = vunpack.c.l.b16 %v92
  %v369 = vunpack.c.l.b16 %v93
  %v370 = vunpack.c.l.b16 %v94
  %v371 = vunpack.c.l.b16 %v95
  %v372 = vunpack.c.l.b16 %v96
  %v373 = vunpack.c.l.b16 %v97
  %v374 = vunpack.c.l.b16 %v98
  %v375 = vunpack.c.l.b16 %v99
  %v376 = vunpack.c.l.b16 %v100
  %v377 = vunpack.c.l.b16 %v101
  %v378 = vunpack.c.l.b16 %v102
  %v379 = vunpack.c.l.b16 %v103
  %v380 = vunpack.c.l.b16 %v104
  %v381 = vunpack.c.l.b16 %v105
  %v382 = vunpack.c.l.b16 %v106
  %v383 = vunpack.c.l.b16 %v107
  %v384 = vunpack.c.l.b16 %v108
  %v385 = vunpack.c.l.b16 %v109
  %v386 = vunpack.c.l.b16 %v110
  %v387 = vunpack.c.l.b16 %v111
  %v388 = vunpack.c.l.b16 %v112
  %v389 = vunpack.c.l.b16 %v113
  %v390 = vunpack.c.l.b16 %v114
  %v391 = vunpack.c.l.b16 %v115
  %v392 = vunpack.c.l.b16 %v116
  %v393 = vunpack.c.l.b16 %v117
  %v394 = vunpack.c.l.b16 %v118
  %v395 = vunpack.c.l.b16 %v119
  %v396 = vunpack.c.l.b16 %v120
  %v397 = vunpack.c.l.b16 %v121
  %v398 = vunpack.c.l.b16 %v122
  %v399 = vunpack.c.l.b16 %v123
  %v400 = vunpack.c.l.b16 %v124
  %v401 = vunpack.c.l.b16 %v125
  %v402 = vunpack.c.l.b16 %v126
  %v403 = vunpack.c.l.b16 %v127
  %v404 = vunpack.c.l.b16 %v128
  %v405 = vunpack.c.l.b16 %v129
  %v406 = vunpack.c.l.b16 %v130
  %v407 = vunpack.c.l.b16 %v131
  %v408 = vunpack.c.l.b16 %v132
  %v409 = vunpack.c.l.b16 %v133
  %v410 = vunpack.c.l.b16 %v134
  %v411 = vunpack.c.l.b16 %v135
  %v412 = vunpack.c.l.b16 %v136
  %v413 = vunpack.c.l.b16 %v137
  %v414 = vunpack.c.l.b16 %v138
  %v415 = vunpack.c.l.b16 %v139
  %v416 = vunpack.c.l.b16 %v140
  %v417 = vunpack.c.l.b16 %v141
  %v418 = vpack.c.b16 %v291, %v290
  %v419 = vpack.c.b16 %v293, %v292
  %v420 = vpack.c.b16 %v295, %v294
  %v421 = vpack.c.b16 %v297, %v296
  %v422 = vpack.c.b16 %v299, %v298
  %v423 = vpack.c.b16 %v301, %v300
  %v424 = vpack.c.b16 %v303, %v302
  %v425 = vpack.c.b16 %v305, %v304
  %v426 = vpack.c.b16 %v307, %v306
  %v427 = vpack.c.b16 %v309, %v308
  %v428 = vpack.c.b16 %v311, %v310
  %v429 = vpack.c.b16 %v313, %v312
  %v430 = vpack.c.b16 %v315, %v314
  %v431 = vpack.c.b16 %v317, %v316
  %v432 = vpack.c.b16 %v319, %v318
  %v433 = vpack.c.b16 %v321, %v320
  %v434 = vpack.c.b16 %v323, %v322
  %v435 = vpack.c.b16 %v325, %v324
  %v436 = vpack.c.b16 %v327, %v326
  %v437 = vpack.c.b16 %v329, %v328
  %v438 = vpack.c.b16 %v331, %v330
  %v439 = vpack.c.b16 %v333, %v332
  %v440 = vpack.c.b16 %v335, %v334
  %v441 = vpack.c.b16 %v337, %v336
  %v442 = vpack.c.b16 %v339, %v338
  %v443 = vpack.c.b16 %v341, %v340
  %v444 = vpack.c.b16 %v343, %v342
  %v445 = vpack.c.b16 %v345, %v344
  %v446 = vpack.c.b16 %v347, %v346
  %v447 = vpack.c.b16 %v349, %v348
  %v448 = vpack.c.b16 %v351, %v350
  %v449 = vpack.c.b16 %v353, %v352
  %v450 = vpack.c.b16 %v355, %v354
  %v451 = vpack.c.b16 %v357, %v356
  %v452 = vpack.c.b16 %v359, %v358
  %v453 = vpack.c.b16 %v361, %v360
  %v454 = vpack.c.b16 %v363, %v362
  %v455 = vpack.c.b16 %v365, %v364
  %v456 = vpack.c.b16 %v367, %v366
  %v457 = vpack.c.b16 %v369, %v368
  %v458 = vpack.c.b16 %v371, %v370
  %v459 = vpack.c.b16 %v373, %v372
  %v460 = vpack.c.b16 %v375, %v374
  %v461 = vpack.c.b16 %v377, %v376
  %v462 = vpack.c.b16 %v379, %v378
  %v463 = vpack.c.b16 %v381, %v380
  %v464 = vpack.c.b16 %v383, %v382
  %v465 = vpack.c.b16 %v385, %v384
  %v466 = vpack.c.b16 %v387, %v386
  %v467 = vpack.c.b16 %v389, %v388
  %v468 = vpack.c.b16 %v391, %v390
  %v469 = vpack.c.b16 %v393, %v392
  %v470 = vpack.c.b16 %v395, %v394
  %v471 = vpack.c.b16 %v397, %v396
  %v472 = vpack.c.b16 %v399, %v398
  %v473 = vpack.c.b16 %v401, %v400
  %v474 = vpack.c.b16 %v403, %v402
  %v475 = vpack.c.b16 %v405, %v404
  %v476 = vpack.c.b16 %v407, %v406
  %v477 = vpack.c.b16 %v409, %v408
  %v478 = vpack.c.b16 %v411, %v410
  %v479 = vpack.c.b16 %v413, %v412
  %v480 = vpack.c.b16 %v415, %v414
  %v481 = vpack.c.b16 %v417, %v416
  %v562 = vunpack.c.l.b16 %v142
  %v563 = vunpack.c.l.b16 %v143
  %v564 = vunpack.c.l.b16 %v144
  %v565 = vunpack.c.l.b16 %v145
  %v566 = vunpack.c.l.b16 %v146
  %v567 = vunpack.c.l.b16 %v147
  %v568 = vunpack.c.l.b16 %v148
  %v569 = vunpack.c.l.b16 %v149
  %v570 = vunpack.c.l.b16 %v150
  %v571 = vunpack.c.l.b16 %v151
  %v572 = vunpack.c.l.b16 %v152
  %v573 = vunpack.c.l.b16 %v153
  %v574 = vunpack.c.l.b16 %v154
  %v575 = vunpack.c.l.b16 %v155
  %v576 = vunpack.c.l.b16 %v156
  %v577 = vunpack.c.l.b16 %v157
  %v578 = vpack.c.b16 %v563, %v562
  %v579 = vpack.c.b16 %v565, %v564
  %v580 = vpack.c.b16 %v567, %v566
  %v581 = vpack.c.b16 %v569, %v568
  %v582 = vpack.c.b16 %v571, %v570
  %v583 = vpack.c.b16 %v573, %v572
  %v584 = vpack.c.b16 %v575, %v574
  %v585 = vpack.c.b16 %v577, %v576
  %594 = vmatpush.bf16.msra.mxu0 %v585
  %595 = vmatpush.bf16.msra.mxu0 %v584
  %596 = vmatpush.bf16.msra.mxu0 %v583
  %597 = vmatpush.bf16.msra.mxu0 %v582
  %598 = vmatpush.bf16.msra.mxu0 %v581
  %599 = vmatpush.bf16.msra.mxu0 %v580
  %600 = vmatpush.bf16.msra.mxu0 %v579
  %601 = vmatpush.bf16.msra.mxu0 %v578
  %602 = vmatmul.bf16.gmra.mxu0 %v418
  %v603 = vpop.f32.mrf.mxu0
  %v604 = vadd.f32 %v160, %v603
  %v605 = vpop.f32.mrf.mxu0
  %v606 = vadd.f32 %v160, %v605
  %607 = vmatmul.bf16.gmra.mxu0 %v419
  %v608 = vpop.f32.mrf.mxu0
  %v609 = vadd.f32 %v160, %v608
  %v610 = vpop.f32.mrf.mxu0
  %v611 = vadd.f32 %v160, %v610
  %612 = vmatmul.bf16.gmra.mxu0 %v420
  %v613 = vpop.f32.mrf.mxu0
  %v614 = vadd.f32 %v160, %v613
  %v615 = vpop.f32.mrf.mxu0
  %v616 = vadd.f32 %v160, %v615
  %617 = vmatmul.bf16.gmra.mxu0 %v421
  %v618 = vpop.f32.mrf.mxu0
  %v619 = vadd.f32 %v160, %v618
  %v620 = vpop.f32.mrf.mxu0
  %v621 = vadd.f32 %v160, %v620
  %622 = vmatmul.bf16.gmra.mxu0 %v422
  %v623 = vpop.f32.mrf.mxu0
  %v624 = vadd.f32 %v160, %v623
  %v625 = vpop.f32.mrf.mxu0
  %v626 = vadd.f32 %v160, %v625
  %627 = vmatmul.bf16.gmra.mxu0 %v423
  %v628 = vpop.f32.mrf.mxu0
  %v629 = vadd.f32 %v160, %v628
  %v630 = vpop.f32.mrf.mxu0
  %v631 = vadd.f32 %v160, %v630
  %632 = vmatmul.bf16.gmra.mxu0 %v424
  %v633 = vpop.f32.mrf.mxu0
  %v634 = vadd.f32 %v160, %v633
  %v635 = vpop.f32.mrf.mxu0
  %v636 = vadd.f32 %v160, %v635
  %637 = vmatmul.bf16.gmra.mxu0 %v425
  %v638 = vpop.f32.mrf.mxu0
  %v639 = vadd.f32 %v160, %v638
  %v640 = vpop.f32.mrf.mxu0
  %v641 = vadd.f32 %v160, %v640
  %642 = vmatmul.bf16.gmra.mxu0 %v426
  %v643 = vpop.f32.mrf.mxu0
  %v644 = vadd.f32 %v160, %v643
  %v645 = vpop.f32.mrf.mxu0
  %v646 = vadd.f32 %v160, %v645
  %647 = vmatmul.bf16.gmra.mxu0 %v427
  %v648 = vpop.f32.mrf.mxu0
  %v649 = vadd.f32 %v160, %v648
  %v650 = vpop.f32.mrf.mxu0
  %v651 = vadd.f32 %v160, %v650
  %652 = vmatmul.bf16.gmra.mxu0 %v428
  %v653 = vpop.f32.mrf.mxu0
  %v654 = vadd.f32 %v160, %v653
  %v655 = vpop.f32.mrf.mxu0
  %v656 = vadd.f32 %v160, %v655
  %657 = vmatmul.bf16.gmra.mxu0 %v429
  %v658 = vpop.f32.mrf.mxu0
  %v659 = vadd.f32 %v160, %v658
  %v660 = vpop.f32.mrf.mxu0
  %v661 = vadd.f32 %v160, %v660
  %662 = vmatmul.bf16.gmra.mxu0 %v430
  %v663 = vpop.f32.mrf.mxu0
  %v664 = vadd.f32 %v160, %v663
  %v665 = vpop.f32.mrf.mxu0
  %v666 = vadd.f32 %v160, %v665
  %667 = vmatmul.bf16.gmra.mxu0 %v431
  %v668 = vpop.f32.mrf.mxu0
  %v669 = vadd.f32 %v160, %v668
  %v670 = vpop.f32.mrf.mxu0
  %v671 = vadd.f32 %v160, %v670
  %672 = vmatmul.bf16.gmra.mxu0 %v432
  %v673 = vpop.f32.mrf.mxu0
  %v674 = vadd.f32 %v160, %v673
  %v675 = vpop.f32.mrf.mxu0
  %v676 = vadd.f32 %v160, %v675
  %677 = vmatmul.bf16.gmra.mxu0 %v433
  %v678 = vpop.f32.mrf.mxu0
  %v679 = vadd.f32 %v160, %v678
  %v680 = vpop.f32.mrf.mxu0
  %v681 = vadd.f32 %v160, %v680
  %682 = vmatmul.bf16.gmra.mxu0 %v434
  %v683 = vpop.f32.mrf.mxu0
  %v684 = vadd.f32 %v160, %v683
  %v685 = vpop.f32.mrf.mxu0
  %v686 = vadd.f32 %v160, %v685
  %687 = vmatmul.bf16.gmra.mxu0 %v435
  %v688 = vpop.f32.mrf.mxu0
  %v689 = vadd.f32 %v160, %v688
  %v690 = vpop.f32.mrf.mxu0
  %v691 = vadd.f32 %v160, %v690
  %692 = vmatmul.bf16.gmra.mxu0 %v436
  %v693 = vpop.f32.mrf.mxu0
  %v694 = vadd.f32 %v160, %v693
  %v695 = vpop.f32.mrf.mxu0
  %v696 = vadd.f32 %v160, %v695
  %697 = vmatmul.bf16.gmra.mxu0 %v437
  %v698 = vpop.f32.mrf.mxu0
  %v699 = vadd.f32 %v160, %v698
  %v700 = vpop.f32.mrf.mxu0
  %v701 = vadd.f32 %v160, %v700
  %702 = vmatmul.bf16.gmra.mxu0 %v438
  %v703 = vpop.f32.mrf.mxu0
  %v704 = vadd.f32 %v160, %v703
  %v705 = vpop.f32.mrf.mxu0
  %v706 = vadd.f32 %v160, %v705
  %707 = vmatmul.bf16.gmra.mxu0 %v439
  %v708 = vpop.f32.mrf.mxu0
  %v709 = vadd.f32 %v160, %v708
  %v710 = vpop.f32.mrf.mxu0
  %v711 = vadd.f32 %v160, %v710
  %712 = vmatmul.bf16.gmra.mxu0 %v440
  %v713 = vpop.f32.mrf.mxu0
  %v714 = vadd.f32 %v160, %v713
  %v715 = vpop.f32.mrf.mxu0
  %v716 = vadd.f32 %v160, %v715
  %717 = vmatmul.bf16.gmra.mxu0 %v441
  %v718 = vpop.f32.mrf.mxu0
  %v719 = vadd.f32 %v160, %v718
  %v720 = vpop.f32.mrf.mxu0
  %v721 = vadd.f32 %v160, %v720
  %722 = vmatmul.bf16.gmra.mxu0 %v442
  %v723 = vpop.f32.mrf.mxu0
  %v724 = vadd.f32 %v160, %v723
  %v725 = vpop.f32.mrf.mxu0
  %v726 = vadd.f32 %v160, %v725
  %727 = vmatmul.bf16.gmra.mxu0 %v443
  %v728 = vpop.f32.mrf.mxu0
  %v729 = vadd.f32 %v160, %v728
  %v730 = vpop.f32.mrf.mxu0
  %v731 = vadd.f32 %v160, %v730
  %732 = vmatmul.bf16.gmra.mxu0 %v444
  %v733 = vpop.f32.mrf.mxu0
  %v734 = vadd.f32 %v160, %v733
  %v735 = vpop.f32.mrf.mxu0
  %v736 = vadd.f32 %v160, %v735
  %737 = vmatmul.bf16.gmra.mxu0 %v445
  %v738 = vpop.f32.mrf.mxu0
  %v739 = vadd.f32 %v160, %v738
  %v740 = vpop.f32.mrf.mxu0
  %v741 = vadd.f32 %v160, %v740
  %742 = vmatmul.bf16.gmra.mxu0 %v446
  %v743 = vpop.f32.mrf.mxu0
  %v744 = vadd.f32 %v160, %v743
  %v745 = vpop.f32.mrf.mxu0
  %v746 = vadd.f32 %v160, %v745
  %747 = vmatmul.bf16.gmra.mxu0 %v447
  %v748 = vpop.f32.mrf.mxu0
  %v749 = vadd.f32 %v160, %v748
  %v750 = vpop.f32.mrf.mxu0
  %v751 = vadd.f32 %v160, %v750
  %752 = vmatmul.bf16.gmra.mxu0 %v448
  %v753 = vpop.f32.mrf.mxu0
  %v754 = vadd.f32 %v160, %v753
  %v755 = vpop.f32.mrf.mxu0
  %v756 = vadd.f32 %v160, %v755
  %757 = vmatmul.bf16.gmra.mxu0 %v449
  %v758 = vpop.f32.mrf.mxu0
  %v759 = vadd.f32 %v160, %v758
  %v760 = vpop.f32.mrf.mxu0
  %v761 = vadd.f32 %v160, %v760
  %762 = vmatmul.bf16.gmra.mxu0 %v450
  %v763 = vpop.f32.mrf.mxu0
  %v764 = vadd.f32 %v160, %v763
  %v765 = vpop.f32.mrf.mxu0
  %v766 = vadd.f32 %v160, %v765
  %767 = vmatmul.bf16.gmra.mxu0 %v451
  %v768 = vpop.f32.mrf.mxu0
  %v769 = vadd.f32 %v160, %v768
  %v770 = vpop.f32.mrf.mxu0
  %v771 = vadd.f32 %v160, %v770
  %772 = vmatmul.bf16.gmra.mxu0 %v452
  %v773 = vpop.f32.mrf.mxu0
  %v774 = vadd.f32 %v160, %v773
  %v775 = vpop.f32.mrf.mxu0
  %v776 = vadd.f32 %v160, %v775
  %777 = vmatmul.bf16.gmra.mxu0 %v453
  %v778 = vpop.f32.mrf.mxu0
  %v779 = vadd.f32 %v160, %v778
  %v780 = vpop.f32.mrf.mxu0
  %v781 = vadd.f32 %v160, %v780
  %782 = vmatmul.bf16.gmra.mxu0 %v454
  %v783 = vpop.f32.mrf.mxu0
  %v784 = vadd.f32 %v160, %v783
  %v785 = vpop.f32.mrf.mxu0
  %v786 = vadd.f32 %v160, %v785
  %787 = vmatmul.bf16.gmra.mxu0 %v455
  %v788 = vpop.f32.mrf.mxu0
  %v789 = vadd.f32 %v160, %v788
  %v790 = vpop.f32.mrf.mxu0
  %v791 = vadd.f32 %v160, %v790
  %792 = vmatmul.bf16.gmra.mxu0 %v456
  %v793 = vpop.f32.mrf.mxu0
  %v794 = vadd.f32 %v160, %v793
  %v795 = vpop.f32.mrf.mxu0
  %v796 = vadd.f32 %v160, %v795
  %797 = vmatmul.bf16.gmra.mxu0 %v457
  %v798 = vpop.f32.mrf.mxu0
  %v799 = vadd.f32 %v160, %v798
  %v800 = vpop.f32.mrf.mxu0
  %v801 = vadd.f32 %v160, %v800
  %802 = vmatmul.bf16.gmra.mxu0 %v458
  %v803 = vpop.f32.mrf.mxu0
  %v804 = vadd.f32 %v160, %v803
  %v805 = vpop.f32.mrf.mxu0
  %v806 = vadd.f32 %v160, %v805
  %807 = vmatmul.bf16.gmra.mxu0 %v459
  %v808 = vpop.f32.mrf.mxu0
  %v809 = vadd.f32 %v160, %v808
  %v810 = vpop.f32.mrf.mxu0
  %v811 = vadd.f32 %v160, %v810
  %812 = vmatmul.bf16.gmra.mxu0 %v460
  %v813 = vpop.f32.mrf.mxu0
  %v814 = vadd.f32 %v160, %v813
  %v815 = vpop.f32.mrf.mxu0
  %v816 = vadd.f32 %v160, %v815
  %817 = vmatmul.bf16.gmra.mxu0 %v461
  %v818 = vpop.f32.mrf.mxu0
  %v819 = vadd.f32 %v160, %v818
  %v820 = vpop.f32.mrf.mxu0
  %v821 = vadd.f32 %v160, %v820
  %822 = vmatmul.bf16.gmra.mxu0 %v462
  %v823 = vpop.f32.mrf.mxu0
  %v824 = vadd.f32 %v160, %v823
  %v825 = vpop.f32.mrf.mxu0
  %v826 = vadd.f32 %v160, %v825
  %827 = vmatmul.bf16.gmra.mxu0 %v463
  %v828 = vpop.f32.mrf.mxu0
  %v829 = vadd.f32 %v160, %v828
  %v830 = vpop.f32.mrf.mxu0
  %v831 = vadd.f32 %v160, %v830
  %832 = vmatmul.bf16.gmra.mxu0 %v464
  %v833 = vpop.f32.mrf.mxu0
  %v834 = vadd.f32 %v160, %v833
  %v835 = vpop.f32.mrf.mxu0
  %v836 = vadd.f32 %v160, %v835
  %837 = vmatmul.bf16.gmra.mxu0 %v465
  %v838 = vpop.f32.mrf.mxu0
  %v839 = vadd.f32 %v160, %v838
  %v840 = vpop.f32.mrf.mxu0
  %v841 = vadd.f32 %v160, %v840
  %842 = vmatmul.bf16.gmra.mxu0 %v466
  %v843 = vpop.f32.mrf.mxu0
  %v844 = vadd.f32 %v160, %v843
  %v845 = vpop.f32.mrf.mxu0
  %v846 = vadd.f32 %v160, %v845
  %847 = vmatmul.bf16.gmra.mxu0 %v467
  %v848 = vpop.f32.mrf.mxu0
  %v849 = vadd.f32 %v160, %v848
  %v850 = vpop.f32.mrf.mxu0
  %v851 = vadd.f32 %v160, %v850
  %852 = vmatmul.bf16.gmra.mxu0 %v468
  %v853 = vpop.f32.mrf.mxu0
  %v854 = vadd.f32 %v160, %v853
  %v855 = vpop.f32.mrf.mxu0
  %v856 = vadd.f32 %v160, %v855
  %857 = vmatmul.bf16.gmra.mxu0 %v469
  %v858 = vpop.f32.mrf.mxu0
  %v859 = vadd.f32 %v160, %v858
  %v860 = vpop.f32.mrf.mxu0
  %v861 = vadd.f32 %v160, %v860
  %862 = vmatmul.bf16.gmra.mxu0 %v470
  %v863 = vpop.f32.mrf.mxu0
  %v864 = vadd.f32 %v160, %v863
  %v865 = vpop.f32.mrf.mxu0
  %v866 = vadd.f32 %v160, %v865
  %867 = vmatmul.bf16.gmra.mxu0 %v471
  %v868 = vpop.f32.mrf.mxu0
  %v869 = vadd.f32 %v160, %v868
  %v870 = vpop.f32.mrf.mxu0
  %v871 = vadd.f32 %v160, %v870
  %872 = vmatmul.bf16.gmra.mxu0 %v472
  %v873 = vpop.f32.mrf.mxu0
  %v874 = vadd.f32 %v160, %v873
  %v875 = vpop.f32.mrf.mxu0
  %v876 = vadd.f32 %v160, %v875
  %877 = vmatmul.bf16.gmra.mxu0 %v473
  %v878 = vpop.f32.mrf.mxu0
  %v879 = vadd.f32 %v160, %v878
  %v880 = vpop.f32.mrf.mxu0
  %v881 = vadd.f32 %v160, %v880
  %882 = vmatmul.bf16.gmra.mxu0 %v474
  %v883 = vpop.f32.mrf.mxu0
  %v884 = vadd.f32 %v160, %v883
  %v885 = vpop.f32.mrf.mxu0
  %v886 = vadd.f32 %v160, %v885
  %887 = vmatmul.bf16.gmra.mxu0 %v475
  %v888 = vpop.f32.mrf.mxu0
  %v889 = vadd.f32 %v160, %v888
  %v890 = vpop.f32.mrf.mxu0
  %v891 = vadd.f32 %v160, %v890
  %892 = vmatmul.bf16.gmra.mxu0 %v476
  %v893 = vpop.f32.mrf.mxu0
  %v894 = vadd.f32 %v160, %v893
  %v895 = vpop.f32.mrf.mxu0
  %v896 = vadd.f32 %v160, %v895
  %897 = vmatmul.bf16.gmra.mxu0 %v477
  %v898 = vpop.f32.mrf.mxu0
  %v899 = vadd.f32 %v160, %v898
  %v900 = vpop.f32.mrf.mxu0
  %v901 = vadd.f32 %v160, %v900
  %902 = vmatmul.bf16.gmra.mxu0 %v478
  %v903 = vpop.f32.mrf.mxu0
  %v904 = vadd.f32 %v160, %v903
  %v905 = vpop.f32.mrf.mxu0
  %v906 = vadd.f32 %v160, %v905
  %907 = vmatmul.bf16.gmra.mxu0 %v479
  %v908 = vpop.f32.mrf.mxu0
  %v909 = vadd.f32 %v160, %v908
  %v910 = vpop.f32.mrf.mxu0
  %v911 = vadd.f32 %v160, %v910
  %912 = vmatmul.bf16.gmra.mxu0 %v480
  %v913 = vpop.f32.mrf.mxu0
  %v914 = vadd.f32 %v160, %v913
  %v915 = vpop.f32.mrf.mxu0
  %v916 = vadd.f32 %v160, %v915
  %917 = vmatmul.bf16.gmra.mxu0 %v481
  %v918 = vpop.f32.mrf.mxu0
  %v919 = vadd.f32 %v160, %v918
  %v920 = vpop.f32.mrf.mxu0
  %v921 = vadd.f32 %v160, %v920
  %922 = vdwg.mxu0
  %vm923 = vcmp.gt.f32.partialorder %v604, 0.0
  %vm924 = vcmp.gt.f32.partialorder %v606, 0.0
  %vm925 = vcmp.gt.f32.partialorder %v609, 0.0
  %vm926 = vcmp.gt.f32.partialorder %v611, 0.0
  %vm927 = vcmp.gt.f32.partialorder %v614, 0.0
  %vm928 = vcmp.gt.f32.partialorder %v616, 0.0
  %vm929 = vcmp.gt.f32.partialorder %v619, 0.0
  %vm930 = vcmp.gt.f32.partialorder %v621, 0.0
  %vm931 = vcmp.gt.f32.partialorder %v624, 0.0
  %vm932 = vcmp.gt.f32.partialorder %v626, 0.0
  %vm933 = vcmp.gt.f32.partialorder %v629, 0.0
  %vm934 = vcmp.gt.f32.partialorder %v631, 0.0
  %vm935 = vcmp.gt.f32.partialorder %v634, 0.0
  %vm936 = vcmp.gt.f32.partialorder %v636, 0.0
  %vm937 = vcmp.gt.f32.partialorder %v639, 0.0
  %vm938 = vcmp.gt.f32.partialorder %v641, 0.0
  %vm939 = vcmp.gt.f32.partialorder %v644, 0.0
  %vm940 = vcmp.gt.f32.partialorder %v646, 0.0
  %vm941 = vcmp.gt.f32.partialorder %v649, 0.0
  %vm942 = vcmp.gt.f32.partialorder %v651, 0.0
  %vm943 = vcmp.gt.f32.partialorder %v654, 0.0
  %vm944 = vcmp.gt.f32.partialorder %v656, 0.0
  %vm945 = vcmp.gt.f32.partialorder %v659, 0.0
  %vm946 = vcmp.gt.f32.partialorder %v661, 0.0
  %vm947 = vcmp.gt.f32.partialorder %v664, 0.0
  %vm948 = vcmp.gt.f32.partialorder %v666, 0.0
  %vm949 = vcmp.gt.f32.partialorder %v669, 0.0
  %vm950 = vcmp.gt.f32.partialorder %v671, 0.0
  %vm951 = vcmp.gt.f32.partialorder %v674, 0.0
  %vm952 = vcmp.gt.f32.partialorder %v676, 0.0
  %vm953 = vcmp.gt.f32.partialorder %v679, 0.0
  %vm954 = vcmp.gt.f32.partialorder %v681, 0.0
  %vm955 = vcmp.gt.f32.partialorder %v684, 0.0
  %vm956 = vcmp.gt.f32.partialorder %v686, 0.0
  %vm957 = vcmp.gt.f32.partialorder %v689, 0.0
  %vm958 = vcmp.gt.f32.partialorder %v691, 0.0
  %vm959 = vcmp.gt.f32.partialorder %v694, 0.0
  %vm960 = vcmp.gt.f32.partialorder %v696, 0.0
  %vm961 = vcmp.gt.f32.partialorder %v699, 0.0
  %vm962 = vcmp.gt.f32.partialorder %v701, 0.0
  %vm963 = vcmp.gt.f32.partialorder %v704, 0.0
  %vm964 = vcmp.gt.f32.partialorder %v706, 0.0
  %vm965 = vcmp.gt.f32.partialorder %v709, 0.0
  %vm966 = vcmp.gt.f32.partialorder %v711, 0.0
  %vm967 = vcmp.gt.f32.partialorder %v714, 0.0
  %vm968 = vcmp.gt.f32.partialorder %v716, 0.0
  %vm969 = vcmp.gt.f32.partialorder %v719, 0.0
  %vm970 = vcmp.gt.f32.partialorder %v721, 0.0
  %vm971 = vcmp.gt.f32.partialorder %v724, 0.0
  %vm972 = vcmp.gt.f32.partialorder %v726, 0.0
  %vm973 = vcmp.gt.f32.partialorder %v729, 0.0
  %vm974 = vcmp.gt.f32.partialorder %v731, 0.0
  %vm975 = vcmp.gt.f32.partialorder %v734, 0.0
  %vm976 = vcmp.gt.f32.partialorder %v736, 0.0
  %vm977 = vcmp.gt.f32.partialorder %v739, 0.0
  %vm978 = vcmp.gt.f32.partialorder %v741, 0.0
  %vm979 = vcmp.gt.f32.partialorder %v744, 0.0
  %vm980 = vcmp.gt.f32.partialorder %v746, 0.0
  %vm981 = vcmp.gt.f32.partialorder %v749, 0.0
  %vm982 = vcmp.gt.f32.partialorder %v751, 0.0
  %vm983 = vcmp.gt.f32.partialorder %v754, 0.0
  %vm984 = vcmp.gt.f32.partialorder %v756, 0.0
  %vm985 = vcmp.gt.f32.partialorder %v759, 0.0
  %vm986 = vcmp.gt.f32.partialorder %v761, 0.0
  %vm987 = vcmp.gt.f32.partialorder %v764, 0.0
  %vm988 = vcmp.gt.f32.partialorder %v766, 0.0
  %vm989 = vcmp.gt.f32.partialorder %v769, 0.0
  %vm990 = vcmp.gt.f32.partialorder %v771, 0.0
  %vm991 = vcmp.gt.f32.partialorder %v774, 0.0
  %vm992 = vcmp.gt.f32.partialorder %v776, 0.0
  %vm993 = vcmp.gt.f32.partialorder %v779, 0.0
  %vm994 = vcmp.gt.f32.partialorder %v781, 0.0
  %vm995 = vcmp.gt.f32.partialorder %v784, 0.0
  %vm996 = vcmp.gt.f32.partialorder %v786, 0.0
  %vm997 = vcmp.gt.f32.partialorder %v789, 0.0
  %vm998 = vcmp.gt.f32.partialorder %v791, 0.0
  %vm999 = vcmp.gt.f32.partialorder %v794, 0.0
  %vm1000 = vcmp.gt.f32.partialorder %v796, 0.0
  %vm1001 = vcmp.gt.f32.partialorder %v799, 0.0
  %vm1002 = vcmp.gt.f32.partialorder %v801, 0.0
  %vm1003 = vcmp.gt.f32.partialorder %v804, 0.0
  %vm1004 = vcmp.gt.f32.partialorder %v806, 0.0
  %vm1005 = vcmp.gt.f32.partialorder %v809, 0.0
  %vm1006 = vcmp.gt.f32.partialorder %v811, 0.0
  %vm1007 = vcmp.gt.f32.partialorder %v814, 0.0
  %vm1008 = vcmp.gt.f32.partialorder %v816, 0.0
  %vm1009 = vcmp.gt.f32.partialorder %v819, 0.0
  %vm1010 = vcmp.gt.f32.partialorder %v821, 0.0
  %vm1011 = vcmp.gt.f32.partialorder %v824, 0.0
  %vm1012 = vcmp.gt.f32.partialorder %v826, 0.0
  %vm1013 = vcmp.gt.f32.partialorder %v829, 0.0
  %vm1014 = vcmp.gt.f32.partialorder %v831, 0.0
  %vm1015 = vcmp.gt.f32.partialorder %v834, 0.0
  %vm1016 = vcmp.gt.f32.partialorder %v836, 0.0
  %vm1017 = vcmp.gt.f32.partialorder %v839, 0.0
  %vm1018 = vcmp.gt.f32.partialorder %v841, 0.0
  %vm1019 = vcmp.gt.f32.partialorder %v844, 0.0
  %vm1020 = vcmp.gt.f32.partialorder %v846, 0.0
  %vm1021 = vcmp.gt.f32.partialorder %v849, 0.0
  %vm1022 = vcmp.gt.f32.partialorder %v851, 0.0
  %vm1023 = vcmp.gt.f32.partialorder %v854, 0.0
  %vm1024 = vcmp.gt.f32.partialorder %v856, 0.0
  %vm1025 = vcmp.gt.f32.partialorder %v859, 0.0
  %vm1026 = vcmp.gt.f32.partialorder %v861, 0.0
  %vm1027 = vcmp.gt.f32.partialorder %v864, 0.0
  %vm1028 = vcmp.gt.f32.partialorder %v866, 0.0
  %vm1029 = vcmp.gt.f32.partialorder %v869, 0.0
  %vm1030 = vcmp.gt.f32.partialorder %v871, 0.0
  %vm1031 = vcmp.gt.f32.partialorder %v874, 0.0
  %vm1032 = vcmp.gt.f32.partialorder %v876, 0.0
  %vm1033 = vcmp.gt.f32.partialorder %v879, 0.0
  %vm1034 = vcmp.gt.f32.partialorder %v881, 0.0
  %vm1035 = vcmp.gt.f32.partialorder %v884, 0.0
  %vm1036 = vcmp.gt.f32.partialorder %v886, 0.0
  %vm1037 = vcmp.gt.f32.partialorder %v889, 0.0
  %vm1038 = vcmp.gt.f32.partialorder %v891, 0.0
  %vm1039 = vcmp.gt.f32.partialorder %v894, 0.0
  %vm1040 = vcmp.gt.f32.partialorder %v896, 0.0
  %vm1041 = vcmp.gt.f32.partialorder %v899, 0.0
  %vm1042 = vcmp.gt.f32.partialorder %v901, 0.0
  %vm1043 = vcmp.gt.f32.partialorder %v904, 0.0
  %vm1044 = vcmp.gt.f32.partialorder %v906, 0.0
  %vm1045 = vcmp.gt.f32.partialorder %v909, 0.0
  %vm1046 = vcmp.gt.f32.partialorder %v911, 0.0
  %vm1047 = vcmp.gt.f32.partialorder %v914, 0.0
  %vm1048 = vcmp.gt.f32.partialorder %v916, 0.0
  %vm1049 = vcmp.gt.f32.partialorder %v919, 0.0
  %vm1050 = vcmp.gt.f32.partialorder %v921, 0.0
  %v1051 = vmul.f32 %v604, 0.01
  %v1052 = vmul.f32 %v606, 0.01
  %v1053 = vmul.f32 %v609, 0.01
  %v1054 = vmul.f32 %v611, 0.01
  %v1055 = vmul.f32 %v614, 0.01
  %v1056 = vmul.f32 %v616, 0.01
  %v1057 = vmul.f32 %v619, 0.01
  %v1058 = vmul.f32 %v621, 0.01
  %v1059 = vmul.f32 %v624, 0.01
  %v1060 = vmul.f32 %v626, 0.01
  %v1061 = vmul.f32 %v629, 0.01
  %v1062 = vmul.f32 %v631, 0.01
  %v1063 = vmul.f32 %v634, 0.01
  %v1064 = vmul.f32 %v636, 0.01
  %v1065 = vmul.f32 %v639, 0.01
  %v1066 = vmul.f32 %v641, 0.01
  %v1067 = vmul.f32 %v644, 0.01
  %v1068 = vmul.f32 %v646, 0.01
  %v1069 = vmul.f32 %v649, 0.01
  %v1070 = vmul.f32 %v651, 0.01
  %v1071 = vmul.f32 %v654, 0.01
  %v1072 = vmul.f32 %v656, 0.01
  %v1073 = vmul.f32 %v659, 0.01
  %v1074 = vmul.f32 %v661, 0.01
  %v1075 = vmul.f32 %v664, 0.01
  %v1076 = vmul.f32 %v666, 0.01
  %v1077 = vmul.f32 %v669, 0.01
  %v1078 = vmul.f32 %v671, 0.01
  %v1079 = vmul.f32 %v674, 0.01
  %v1080 = vmul.f32 %v676, 0.01
  %v1081 = vmul.f32 %v679, 0.01
  %v1082 = vmul.f32 %v681, 0.01
  %v1083 = vmul.f32 %v684, 0.01
  %v1084 = vmul.f32 %v686, 0.01
  %v1085 = vmul.f32 %v689, 0.01
  %v1086 = vmul.f32 %v691, 0.01
  %v1087 = vmul.f32 %v694, 0.01
  %v1088 = vmul.f32 %v696, 0.01
  %v1089 = vmul.f32 %v699, 0.01
  %v1090 = vmul.f32 %v701, 0.01
  %v1091 = vmul.f32 %v704, 0.01
  %v1092 = vmul.f32 %v706, 0.01
  %v1093 = vmul.f32 %v709, 0.01
  %v1094 = vmul.f32 %v711, 0.01
  %v1095 = vmul.f32 %v714, 0.01
  %v1096 = vmul.f32 %v716, 0.01
  %v1097 = vmul.f32 %v719, 0.01
  %v1098 = vmul.f32 %v721, 0.01
  %v1099 = vmul.f32 %v724, 0.01
  %v1100 = vmul.f32 %v726, 0.01
  %v1101 = vmul.f32 %v729, 0.01
  %v1102 = vmul.f32 %v731, 0.01
  %v1103 = vmul.f32 %v734, 0.01
  %v1104 = vmul.f32 %v736, 0.01
  %v1105 = vmul.f32 %v739, 0.01
  %v1106 = vmul.f32 %v741, 0.01
  %v1107 = vmul.f32 %v744, 0.01
  %v1108 = vmul.f32 %v746, 0.01
  %v1109 = vmul.f32 %v749, 0.01
  %v1110 = vmul.f32 %v751, 0.01
  %v1111 = vmul.f32 %v754, 0.01
  %v1112 = vmul.f32 %v756, 0.01
  %v1113 = vmul.f32 %v759, 0.01
  %v1114 = vmul.f32 %v761, 0.01
  %v1115 = vmul.f32 %v764, 0.01
  %v1116 = vmul.f32 %v766, 0.01
  %v1117 = vmul.f32 %v769, 0.01
  %v1118 = vmul.f32 %v771, 0.01
  %v1119 = vmul.f32 %v774, 0.01
  %v1120 = vmul.f32 %v776, 0.01
  %v1121 = vmul.f32 %v779, 0.01
  %v1122 = vmul.f32 %v781, 0.01
  %v1123 = vmul.f32 %v784, 0.01
  %v1124 = vmul.f32 %v786, 0.01
  %v1125 = vmul.f32 %v789, 0.01
  %v1126 = vmul.f32 %v791, 0.01
  %v1127 = vmul.f32 %v794, 0.01
  %v1128 = vmul.f32 %v796, 0.01
  %v1129 = vmul.f32 %v799, 0.01
  %v1130 = vmul.f32 %v801, 0.01
  %v1131 = vmul.f32 %v804, 0.01
  %v1132 = vmul.f32 %v806, 0.01
  %v1133 = vmul.f32 %v809, 0.01
  %v1134 = vmul.f32 %v811, 0.01
  %v1135 = vmul.f32 %v814, 0.01
  %v1136 = vmul.f32 %v816, 0.01
  %v1137 = vmul.f32 %v819, 0.01
  %v1138 = vmul.f32 %v821, 0.01
  %v1139 = vmul.f32 %v824, 0.01
  %v1140 = vmul.f32 %v826, 0.01
  %v1141 = vmul.f32 %v829, 0.01
  %v1142 = vmul.f32 %v831, 0.01
  %v1143 = vmul.f32 %v834, 0.01
  %v1144 = vmul.f32 %v836, 0.01
  %v1145 = vmul.f32 %v839, 0.01
  %v1146 = vmul.f32 %v841, 0.01
  %v1147 = vmul.f32 %v844, 0.01
  %v1148 = vmul.f32 %v846, 0.01
  %v1149 = vmul.f32 %v849, 0.01
  %v1150 = vmul.f32 %v851, 0.01
  %v1151 = vmul.f32 %v854, 0.01
  %v1152 = vmul.f32 %v856, 0.01
  %v1153 = vmul.f32 %v859, 0.01
  %v1154 = vmul.f32 %v861, 0.01
  %v1155 = vmul.f32 %v864, 0.01
  %v1156 = vmul.f32 %v866, 0.01
  %v1157 = vmul.f32 %v869, 0.01
  %v1158 = vmul.f32 %v871, 0.01
  %v1159 = vmul.f32 %v874, 0.01
  %v1160 = vmul.f32 %v876, 0.01
  %v1161 = vmul.f32 %v879, 0.01
  %v1162 = vmul.f32 %v881, 0.01
  %v1163 = vmul.f32 %v884, 0.01
  %v1164 = vmul.f32 %v886, 0.01
  %v1165 = vmul.f32 %v889, 0.01
  %v1166 = vmul.f32 %v891, 0.01
  %v1167 = vmul.f32 %v894, 0.01
  %v1168 = vmul.f32 %v896, 0.01
  %v1169 = vmul.f32 %v899, 0.01
  %v1170 = vmul.f32 %v901, 0.01
  %v1171 = vmul.f32 %v904, 0.01
  %v1172 = vmul.f32 %v906, 0.01
  %v1173 = vmul.f32 %v909, 0.01
  %v1174 = vmul.f32 %v911, 0.01
  %v1175 = vmul.f32 %v914, 0.01
  %v1176 = vmul.f32 %v916, 0.01
  %v1177 = vmul.f32 %v919, 0.01
  %v1178 = vmul.f32 %v921, 0.01
  %v1179 = vsel %vm923, %v604, %v1051
  %v1180 = vsel %vm924, %v606, %v1052
  %v1181 = vsel %vm925, %v609, %v1053
  %v1182 = vsel %vm926, %v611, %v1054
  %v1183 = vsel %vm927, %v614, %v1055
  %v1184 = vsel %vm928, %v616, %v1056
  %v1185 = vsel %vm929, %v619, %v1057
  %v1186 = vsel %vm930, %v621, %v1058
  %v1187 = vsel %vm931, %v624, %v1059
  %v1188 = vsel %vm932, %v626, %v1060
  %v1189 = vsel %vm933, %v629, %v1061
  %v1190 = vsel %vm934, %v631, %v1062
  %v1191 = vsel %vm935, %v634, %v1063
  %v1192 = vsel %vm936, %v636, %v1064
  %v1193 = vsel %vm937, %v639, %v1065
  %v1194 = vsel %vm938, %v641, %v1066
  %v1195 = vsel %vm939, %v644, %v1067
  %v1196 = vsel %vm940, %v646, %v1068
  %v1197 = vsel %vm941, %v649, %v1069
  %v1198 = vsel %vm942, %v651, %v1070
  %v1199 = vsel %vm943, %v654, %v1071
  %v1200 = vsel %vm944, %v656, %v1072
  %v1201 = vsel %vm945, %v659, %v1073
  %v1202 = vsel %vm946, %v661, %v1074
  %v1203 = vsel %vm947, %v664, %v1075
  %v1204 = vsel %vm948, %v666, %v1076
  %v1205 = vsel %vm949, %v669, %v1077
  %v1206 = vsel %vm950, %v671, %v1078
  %v1207 = vsel %vm951, %v674, %v1079
  %v1208 = vsel %vm952, %v676, %v1080
  %v1209 = vsel %vm953, %v679, %v1081
  %v1210 = vsel %vm954, %v681, %v1082
  %v1211 = vsel %vm955, %v684, %v1083
  %v1212 = vsel %vm956, %v686, %v1084
  %v1213 = vsel %vm957, %v689, %v1085
  %v1214 = vsel %vm958, %v691, %v1086
  %v1215 = vsel %vm959, %v694, %v1087
  %v1216 = vsel %vm960, %v696, %v1088
  %v1217 = vsel %vm961, %v699, %v1089
  %v1218 = vsel %vm962, %v701, %v1090
  %v1219 = vsel %vm963, %v704, %v1091
  %v1220 = vsel %vm964, %v706, %v1092
  %v1221 = vsel %vm965, %v709, %v1093
  %v1222 = vsel %vm966, %v711, %v1094
  %v1223 = vsel %vm967, %v714, %v1095
  %v1224 = vsel %vm968, %v716, %v1096
  %v1225 = vsel %vm969, %v719, %v1097
  %v1226 = vsel %vm970, %v721, %v1098
  %v1227 = vsel %vm971, %v724, %v1099
  %v1228 = vsel %vm972, %v726, %v1100
  %v1229 = vsel %vm973, %v729, %v1101
  %v1230 = vsel %vm974, %v731, %v1102
  %v1231 = vsel %vm975, %v734, %v1103
  %v1232 = vsel %vm976, %v736, %v1104
  %v1233 = vsel %vm977, %v739, %v1105
  %v1234 = vsel %vm978, %v741, %v1106
  %v1235 = vsel %vm979, %v744, %v1107
  %v1236 = vsel %vm980, %v746, %v1108
  %v1237 = vsel %vm981, %v749, %v1109
  %v1238 = vsel %vm982, %v751, %v1110
  %v1239 = vsel %vm983, %v754, %v1111
  %v1240 = vsel %vm984, %v756, %v1112
  %v1241 = vsel %vm985, %v759, %v1113
  %v1242 = vsel %vm986, %v761, %v1114
  %v1243 = vsel %vm987, %v764, %v1115
  %v1244 = vsel %vm988, %v766, %v1116
  %v1245 = vsel %vm989, %v769, %v1117
  %v1246 = vsel %vm990, %v771, %v1118
  %v1247 = vsel %vm991, %v774, %v1119
  %v1248 = vsel %vm992, %v776, %v1120
  %v1249 = vsel %vm993, %v779, %v1121
  %v1250 = vsel %vm994, %v781, %v1122
  %v1251 = vsel %vm995, %v784, %v1123
  %v1252 = vsel %vm996, %v786, %v1124
  %v1253 = vsel %vm997, %v789, %v1125
  %v1254 = vsel %vm998, %v791, %v1126
  %v1255 = vsel %vm999, %v794, %v1127
  %v1256 = vsel %vm1000, %v796, %v1128
  %v1257 = vsel %vm1001, %v799, %v1129
  %v1258 = vsel %vm1002, %v801, %v1130
  %v1259 = vsel %vm1003, %v804, %v1131
  %v1260 = vsel %vm1004, %v806, %v1132
  %v1261 = vsel %vm1005, %v809, %v1133
  %v1262 = vsel %vm1006, %v811, %v1134
  %v1263 = vsel %vm1007, %v814, %v1135
  %v1264 = vsel %vm1008, %v816, %v1136
  %v1265 = vsel %vm1009, %v819, %v1137
  %v1266 = vsel %vm1010, %v821, %v1138
  %v1267 = vsel %vm1011, %v824, %v1139
  %v1268 = vsel %vm1012, %v826, %v1140
  %v1269 = vsel %vm1013, %v829, %v1141
  %v1270 = vsel %vm1014, %v831, %v1142
  %v1271 = vsel %vm1015, %v834, %v1143
  %v1272 = vsel %vm1016, %v836, %v1144
  %v1273 = vsel %vm1017, %v839, %v1145
  %v1274 = vsel %vm1018, %v841, %v1146
  %v1275 = vsel %vm1019, %v844, %v1147
  %v1276 = vsel %vm1020, %v846, %v1148
  %v1277 = vsel %vm1021, %v849, %v1149
  %v1278 = vsel %vm1022, %v851, %v1150
  %v1279 = vsel %vm1023, %v854, %v1151
  %v1280 = vsel %vm1024, %v856, %v1152
  %v1281 = vsel %vm1025, %v859, %v1153
  %v1282 = vsel %vm1026, %v861, %v1154
  %v1283 = vsel %vm1027, %v864, %v1155
  %v1284 = vsel %vm1028, %v866, %v1156
  %v1285 = vsel %vm1029, %v869, %v1157
  %v1286 = vsel %vm1030, %v871, %v1158
  %v1287 = vsel %vm1031, %v874, %v1159
  %v1288 = vsel %vm1032, %v876, %v1160
  %v1289 = vsel %vm1033, %v879, %v1161
  %v1290 = vsel %vm1034, %v881, %v1162
  %v1291 = vsel %vm1035, %v884, %v1163
  %v1292 = vsel %vm1036, %v886, %v1164
  %v1293 = vsel %vm1037, %v889, %v1165
  %v1294 = vsel %vm1038, %v891, %v1166
  %v1295 = vsel %vm1039, %v894, %v1167
  %v1296 = vsel %vm1040, %v896, %v1168
  %v1297 = vsel %vm1041, %v899, %v1169
  %v1298 = vsel %vm1042, %v901, %v1170
  %v1299 = vsel %vm1043, %v904, %v1171
  %v1300 = vsel %vm1044, %v906, %v1172
  %v1301 = vsel %vm1045, %v909, %v1173
  %v1302 = vsel %vm1046, %v911, %v1174
  %v1303 = vsel %vm1047, %v914, %v1175
  %v1304 = vsel %vm1048, %v916, %v1176
  %v1305 = vsel %vm1049, %v919, %v1177
  %v1306 = vsel %vm1050, %v921, %v1178
  %1307 = vst [vmem:[%s3] sm:$0xff] %v1179
  %1308 = vst [vmem:[%s3 + $0x8] sm:$0xff] %v1180
  %1309 = vst [vmem:[%s3 + $0x10] sm:$0xff] %v1181
  %1310 = vst [vmem:[%s3 + $0x18] sm:$0xff] %v1182
  %1311 = vst [vmem:[%s3 + $0x20] sm:$0xff] %v1183
  %1312 = vst [vmem:[%s3 + $0x28] sm:$0xff] %v1184
  %1313 = vst [vmem:[%s3 + $0x30] sm:$0xff] %v1185
  %1314 = vst [vmem:[%s3 + $0x38] sm:$0xff] %v1186
  %1315 = vst [vmem:[%s3 + $0x40] sm:$0xff] %v1187
  %1316 = vst [vmem:[%s3 + $0x48] sm:$0xff] %v1188
  %1317 = vst [vmem:[%s3 + $0x50] sm:$0xff] %v1189
  %1318 = vst [vmem:[%s3 + $0x58] sm:$0xff] %v1190
  %1319 = vst [vmem:[%s3 + $0x60] sm:$0xff] %v1191
  %1320 = vst [vmem:[%s3 + $0x68] sm:$0xff] %v1192
  %1321 = vst [vmem:[%s3 + $0x70] sm:$0xff] %v1193
  %1322 = vst [vmem:[%s3 + $0x78] sm:$0xff] %v1194
  %1323 = vst [vmem:[%s3 + $0x80] sm:$0xff] %v1195
  %1324 = vst [vmem:[%s3 + $0x88] sm:$0xff] %v1196
  %1325 = vst [vmem:[%s3 + $0x90] sm:$0xff] %v1197
  %1326 = vst [vmem:[%s3 + $0x98] sm:$0xff] %v1198
  %1327 = vst [vmem:[%s3 + $0xa0] sm:$0xff] %v1199
  %1328 = vst [vmem:[%s3 + $0xa8] sm:$0xff] %v1200
  %1329 = vst [vmem:[%s3 + $0xb0] sm:$0xff] %v1201
  %1330 = vst [vmem:[%s3 + $0xb8] sm:$0xff] %v1202
  %1331 = vst [vmem:[%s3 + $0xc0] sm:$0xff] %v1203
  %1332 = vst [vmem:[%s3 + $0xc8] sm:$0xff] %v1204
  %1333 = vst [vmem:[%s3 + $0xd0] sm:$0xff] %v1205
  %1334 = vst [vmem:[%s3 + $0xd8] sm:$0xff] %v1206
  %1335 = vst [vmem:[%s3 + $0xe0] sm:$0xff] %v1207
  %1336 = vst [vmem:[%s3 + $0xe8] sm:$0xff] %v1208
  %1337 = vst [vmem:[%s3 + $0xf0] sm:$0xff] %v1209
  %1338 = vst [vmem:[%s3 + $0xf8] sm:$0xff] %v1210
  %1339 = vst [vmem:[%s3 + $0x100] sm:$0xff] %v1211
  %1340 = vst [vmem:[%s3 + $0x108] sm:$0xff] %v1212
  %1341 = vst [vmem:[%s3 + $0x110] sm:$0xff] %v1213
  %1342 = vst [vmem:[%s3 + $0x118] sm:$0xff] %v1214
  %1343 = vst [vmem:[%s3 + $0x120] sm:$0xff] %v1215
  %1344 = vst [vmem:[%s3 + $0x128] sm:$0xff] %v1216
  %1345 = vst [vmem:[%s3 + $0x130] sm:$0xff] %v1217
  %1346 = vst [vmem:[%s3 + $0x138] sm:$0xff] %v1218
  %1347 = vst [vmem:[%s3 + $0x140] sm:$0xff] %v1219
  %1348 = vst [vmem:[%s3 + $0x148] sm:$0xff] %v1220
  %1349 = vst [vmem:[%s3 + $0x150] sm:$0xff] %v1221
  %1350 = vst [vmem:[%s3 + $0x158] sm:$0xff] %v1222
  %1351 = vst [vmem:[%s3 + $0x160] sm:$0xff] %v1223
  %1352 = vst [vmem:[%s3 + $0x168] sm:$0xff] %v1224
  %1353 = vst [vmem:[%s3 + $0x170] sm:$0xff] %v1225
  %1354 = vst [vmem:[%s3 + $0x178] sm:$0xff] %v1226
  %1355 = vst [vmem:[%s3 + $0x180] sm:$0xff] %v1227
  %1356 = vst [vmem:[%s3 + $0x188] sm:$0xff] %v1228
  %1357 = vst [vmem:[%s3 + $0x190] sm:$0xff] %v1229
  %1358 = vst [vmem:[%s3 + $0x198] sm:$0xff] %v1230
  %1359 = vst [vmem:[%s3 + $0x1a0] sm:$0xff] %v1231
  %1360 = vst [vmem:[%s3 + $0x1a8] sm:$0xff] %v1232
  %1361 = vst [vmem:[%s3 + $0x1b0] sm:$0xff] %v1233
  %1362 = vst [vmem:[%s3 + $0x1b8] sm:$0xff] %v1234
  %1363 = vst [vmem:[%s3 + $0x1c0] sm:$0xff] %v1235
  %1364 = vst [vmem:[%s3 + $0x1c8] sm:$0xff] %v1236
  %1365 = vst [vmem:[%s3 + $0x1d0] sm:$0xff] %v1237
  %1366 = vst [vmem:[%s3 + $0x1d8] sm:$0xff] %v1238
  %1367 = vst [vmem:[%s3 + $0x1e0] sm:$0xff] %v1239
  %1368 = vst [vmem:[%s3 + $0x1e8] sm:$0xff] %v1240
  %1369 = vst [vmem:[%s3 + $0x1f0] sm:$0xff] %v1241
  %1370 = vst [vmem:[%s3 + $0x1f8] sm:$0xff] %v1242
  %1371 = vst [vmem:[%s3 + $0x200] sm:$0xff] %v1243
  %1372 = vst [vmem:[%s3 + $0x208] sm:$0xff] %v1244
  %1373 = vst [vmem:[%s3 + $0x210] sm:$0xff] %v1245
  %1374 = vst [vmem:[%s3 + $0x218] sm:$0xff] %v1246
  %1375 = vst [vmem:[%s3 + $0x220] sm:$0xff] %v1247
  %1376 = vst [vmem:[%s3 + $0x228] sm:$0xff] %v1248
  %1377 = vst [vmem:[%s3 + $0x230] sm:$0xff] %v1249
  %1378 = vst [vmem:[%s3 + $0x238] sm:$0xff] %v1250
  %1379 = vst [vmem:[%s3 + $0x240] sm:$0xff] %v1251
  %1380 = vst [vmem:[%s3 + $0x248] sm:$0xff] %v1252
  %1381 = vst [vmem:[%s3 + $0x250] sm:$0xff] %v1253
  %1382 = vst [vmem:[%s3 + $0x258] sm:$0xff] %v1254
  %1383 = vst [vmem:[%s3 + $0x260] sm:$0xff] %v1255
  %1384 = vst [vmem:[%s3 + $0x268] sm:$0xff] %v1256
  %1385 = vst [vmem:[%s3 + $0x270] sm:$0xff] %v1257
  %1386 = vst [vmem:[%s3 + $0x278] sm:$0xff] %v1258
  %1387 = vst [vmem:[%s3 + $0x280] sm:$0xff] %v1259
  %1388 = vst [vmem:[%s3 + $0x288] sm:$0xff] %v1260
  %1389 = vst [vmem:[%s3 + $0x290] sm:$0xff] %v1261
  %1390 = vst [vmem:[%s3 + $0x298] sm:$0xff] %v1262
  %1391 = vst [vmem:[%s3 + $0x2a0] sm:$0xff] %v1263
  %1392 = vst [vmem:[%s3 + $0x2a8] sm:$0xff] %v1264
  %1393 = vst [vmem:[%s3 + $0x2b0] sm:$0xff] %v1265
  %1394 = vst [vmem:[%s3 + $0x2b8] sm:$0xff] %v1266
  %1395 = vst [vmem:[%s3 + $0x2c0] sm:$0xff] %v1267
  %1396 = vst [vmem:[%s3 + $0x2c8] sm:$0xff] %v1268
  %1397 = vst [vmem:[%s3 + $0x2d0] sm:$0xff] %v1269
  %1398 = vst [vmem:[%s3 + $0x2d8] sm:$0xff] %v1270
  %1399 = vst [vmem:[%s3 + $0x2e0] sm:$0xff] %v1271
  %1400 = vst [vmem:[%s3 + $0x2e8] sm:$0xff] %v1272
  %1401 = vst [vmem:[%s3 + $0x2f0] sm:$0xff] %v1273
  %1402 = vst [vmem:[%s3 + $0x2f8] sm:$0xff] %v1274
  %1403 = vst [vmem:[%s3 + $0x300] sm:$0xff] %v1275
  %1404 = vst [vmem:[%s3 + $0x308] sm:$0xff] %v1276
  %1405 = vst [vmem:[%s3 + $0x310] sm:$0xff] %v1277
  %1406 = vst [vmem:[%s3 + $0x318] sm:$0xff] %v1278
  %1407 = vst [vmem:[%s3 + $0x320] sm:$0xff] %v1279
  %1408 = vst [vmem:[%s3 + $0x328] sm:$0xff] %v1280
  %1409 = vst [vmem:[%s3 + $0x330] sm:$0xff] %v1281
  %1410 = vst [vmem:[%s3 + $0x338] sm:$0xff] %v1282
  %1411 = vst [vmem:[%s3 + $0x340] sm:$0xff] %v1283
  %1412 = vst [vmem:[%s3 + $0x348] sm:$0xff] %v1284
  %1413 = vst [vmem:[%s3 + $0x350] sm:$0xff] %v1285
  %1414 = vst [vmem:[%s3 + $0x358] sm:$0xff] %v1286
  %1415 = vst [vmem:[%s3 + $0x360] sm:$0xff] %v1287
  %1416 = vst [vmem:[%s3 + $0x368] sm:$0xff] %v1288
  %1417 = vst [vmem:[%s3 + $0x370] sm:$0xff] %v1289
  %1418 = vst [vmem:[%s3 + $0x378] sm:$0xff] %v1290
  %1419 = vst [vmem:[%s3 + $0x380] sm:$0xff] %v1291
  %1420 = vst [vmem:[%s3 + $0x388] sm:$0xff] %v1292
  %1421 = vst [vmem:[%s3 + $0x390] sm:$0xff] %v1293
  %1422 = vst [vmem:[%s3 + $0x398] sm:$0xff] %v1294
  %1423 = vst [vmem:[%s3 + $0x3a0] sm:$0xff] %v1295
  %1424 = vst [vmem:[%s3 + $0x3a8] sm:$0xff] %v1296
  %1425 = vst [vmem:[%s3 + $0x3b0] sm:$0xff] %v1297
  %1426 = vst [vmem:[%s3 + $0x3b8] sm:$0xff] %v1298
  %1427 = vst [vmem:[%s3 + $0x3c0] sm:$0xff] %v1299
  %1428 = vst [vmem:[%s3 + $0x3c8] sm:$0xff] %v1300
  %1429 = vst [vmem:[%s3 + $0x3d0] sm:$0xff] %v1301
  %1430 = vst [vmem:[%s3 + $0x3d8] sm:$0xff] %v1302
  %1431 = vst [vmem:[%s3 + $0x3e0] sm:$0xff] %v1303
  %1432 = vst [vmem:[%s3 + $0x3e8] sm:$0xff] %v1304
  %1433 = vst [vmem:[%s3 + $0x3f0] sm:$0xff] %v1305
  %1434 = vst [vmem:[%s3 + $0x3f8] sm:$0xff] %v1306
  // Predicated region
  $region14: #{discriminator_dc_forward.4} parent=0 // pred_check
    _
  $region15: #{discriminator_dc_forward.4} parent=0 // pred_check_branch
    %1436 = sbr.rel (0) target = $region17
  $region16: #{discriminator_dc_forward.4} parent=0 // pred_region
    _
  $region17: #{discriminator_dc_forward.4} parent=0 // pred_fallthru
    _
  // Predicated region
  $region18: #{discriminator_dc_forward.4} parent=0 // pred_check
    _
  $region19: #{discriminator_dc_forward.4} parent=0 // pred_check_branch
    %1438 = sbr.rel (0) target = $region21
  $region20: #{discriminator_dc_forward.4} parent=0 // pred_region
    _
  $region21: #{discriminator_dc_forward.4} parent=0 // pred_fallthru
    _

// kernel: discriminator_dc_forward.5
$region0: #{discriminator_dc_forward.5}
  #allocation0 [shape = 'u32[]', space=smem, size = 0x4, offset = 0x4, fixed_abs, tag = 'smem constant byte address 0x4 - core index']
  #allocation1 [shape = 'u32[72,128]{1,0:T(1,128)}', space=vmem, size = 0x9000, scoped, tag = 'internal scratch']
  %s0 = inlined_call_operand.vmem [shape: bf16[128,256], index: 0, kind: input, shape index: {}]
  %s1 = inlined_call_operand.vmem [shape: bf16[256,128], index: 1, kind: input, shape index: {}]
  %s2 = inlined_call_operand.vmem [shape: f32[1,128], index: 2, kind: input, shape index: {}]
  %s3 = inlined_call_operand.vmem [shape: f32[128,128], index: 3, kind: output, shape index: {}]
  %s4 = sld [smem:[#allocation0]]
  $region22: #{discriminator_dc_forward.5} parent=0
    _
  %s6 = ssub.s32 1, %s4
  %s7 = scalar_select 0, %s6, %s4
  // Predicated region
  $region2: #{discriminator_dc_forward.5} parent=0 // pred_check
    _
  $region3: #{discriminator_dc_forward.5} parent=0 // pred_check_branch
    %9 = sbr.rel (0) target = $region5
  $region4: #{discriminator_dc_forward.5} parent=0 // pred_region
    _
  $region5: #{discriminator_dc_forward.5} parent=0 // pred_fallthru
    _
  // Predicated region
  $region6: #{discriminator_dc_forward.5} parent=0 // pred_check
    _
  $region7: #{discriminator_dc_forward.5} parent=0 // pred_check_branch
    %11 = sbr.rel (0) target = $region9
  $region8: #{discriminator_dc_forward.5} parent=0 // pred_region
    _
  $region9: #{discriminator_dc_forward.5} parent=0 // pred_fallthru
    _
  // Predicated region
  $region10: #{discriminator_dc_forward.5} parent=0 // pred_check
    _
  $region11: #{discriminator_dc_forward.5} parent=0 // pred_check_branch
    %13 = sbr.rel (0) target = $region13
  $region12: #{discriminator_dc_forward.5} parent=0 // pred_region
    _
  $region13: #{discriminator_dc_forward.5} parent=0 // pred_fallthru
    _
  %v14 = vld [vmem:[%s0] sm:$0xff]
  %v15 = vld [vmem:[%s0 + $0x8] sm:$0xff]
  %v16 = vld [vmem:[%s0 + $0x10] sm:$0xff]
  %v17 = vld [vmem:[%s0 + $0x18] sm:$0xff]
  %v18 = vld [vmem:[%s0 + $0x20] sm:$0xff]
  %v19 = vld [vmem:[%s0 + $0x28] sm:$0xff]
  %v20 = vld [vmem:[%s0 + $0x30] sm:$0xff]
  %v21 = vld [vmem:[%s0 + $0x38] sm:$0xff]
  %v22 = vld [vmem:[%s0 + $0x40] sm:$0xff]
  %v23 = vld [vmem:[%s0 + $0x48] sm:$0xff]
  %v24 = vld [vmem:[%s0 + $0x50] sm:$0xff]
  %v25 = vld [vmem:[%s0 + $0x58] sm:$0xff]
  %v26 = vld [vmem:[%s0 + $0x60] sm:$0xff]
  %v27 = vld [vmem:[%s0 + $0x68] sm:$0xff]
  %v28 = vld [vmem:[%s0 + $0x70] sm:$0xff]
  %v29 = vld [vmem:[%s0 + $0x78] sm:$0xff]
  %v30 = vld [vmem:[%s1] sm:$0xf]
  %v31 = vld [vmem:[%s1 + $0x4] sm:$0xf]
  %v32 = vld [vmem:[%s1 + $0x8] sm:$0xf]
  %v33 = vld [vmem:[%s1 + $0xc] sm:$0xf]
  %v34 = vld [vmem:[%s1 + $0x10] sm:$0xf]
  %v35 = vld [vmem:[%s1 + $0x14] sm:$0xf]
  %v36 = vld [vmem:[%s1 + $0x18] sm:$0xf]
  %v37 = vld [vmem:[%s1 + $0x1c] sm:$0xf]
  %v38 = vld [vmem:[%s1 + $0x20] sm:$0xf]
  %v39 = vld [vmem:[%s1 + $0x24] sm:$0xf]
  %v40 = vld [vmem:[%s1 + $0x28] sm:$0xf]
  %v41 = vld [vmem:[%s1 + $0x2c] sm:$0xf]
  %v42 = vld [vmem:[%s1 + $0x30] sm:$0xf]
  %v43 = vld [vmem:[%s1 + $0x34] sm:$0xf]
  %v44 = vld [vmem:[%s1 + $0x38] sm:$0xf]
  %v45 = vld [vmem:[%s1 + $0x3c] sm:$0xf]
  %v46 = vld [vmem:[%s1 + $0x40] sm:$0xf]
  %v47 = vld [vmem:[%s1 + $0x44] sm:$0xf]
  %v48 = vld [vmem:[%s1 + $0x48] sm:$0xf]
  %v49 = vld [vmem:[%s1 + $0x4c] sm:$0xf]
  %v50 = vld [vmem:[%s1 + $0x50] sm:$0xf]
  %v51 = vld [vmem:[%s1 + $0x54] sm:$0xf]
  %v52 = vld [vmem:[%s1 + $0x58] sm:$0xf]
  %v53 = vld [vmem:[%s1 + $0x5c] sm:$0xf]
  %v54 = vld [vmem:[%s1 + $0x60] sm:$0xf]
  %v55 = vld [vmem:[%s1 + $0x64] sm:$0xf]
  %v56 = vld [vmem:[%s1 + $0x68] sm:$0xf]
  %v57 = vld [vmem:[%s1 + $0x6c] sm:$0xf]
  %v58 = vld [vmem:[%s1 + $0x70] sm:$0xf]
  %v59 = vld [vmem:[%s1 + $0x74] sm:$0xf]
  %v60 = vld [vmem:[%s1 + $0x78] sm:$0xf]
  %v61 = vld [vmem:[%s1 + $0x7c] sm:$0xf]
  %v62 = vld [vmem:[%s2] sm:$0x1]
  %v64 = vperm.slane %v62, 0
  %v82 = vunpack.c.l.b16 %v14
  %v83 = vunpack.c.h.b16 %v14
  %v84 = vunpack.c.l.b16 %v15
  %v85 = vunpack.c.h.b16 %v15
  %v86 = vunpack.c.l.b16 %v16
  %v87 = vunpack.c.h.b16 %v16
  %v88 = vunpack.c.l.b16 %v17
  %v89 = vunpack.c.h.b16 %v17
  %v90 = vunpack.c.l.b16 %v18
  %v91 = vunpack.c.h.b16 %v18
  %v92 = vunpack.c.l.b16 %v19
  %v93 = vunpack.c.h.b16 %v19
  %v94 = vunpack.c.l.b16 %v20
  %v95 = vunpack.c.h.b16 %v20
  %v96 = vunpack.c.l.b16 %v21
  %v97 = vunpack.c.h.b16 %v21
  %v98 = vunpack.c.l.b16 %v22
  %v99 = vunpack.c.h.b16 %v22
  %v100 = vunpack.c.l.b16 %v23
  %v101 = vunpack.c.h.b16 %v23
  %v102 = vunpack.c.l.b16 %v24
  %v103 = vunpack.c.h.b16 %v24
  %v104 = vunpack.c.l.b16 %v25
  %v105 = vunpack.c.h.b16 %v25
  %v106 = vunpack.c.l.b16 %v26
  %v107 = vunpack.c.h.b16 %v26
  %v108 = vunpack.c.l.b16 %v27
  %v109 = vunpack.c.h.b16 %v27
  %v110 = vunpack.c.l.b16 %v28
  %v111 = vunpack.c.h.b16 %v28
  %v112 = vunpack.c.l.b16 %v29
  %v113 = vunpack.c.h.b16 %v29
  %v114 = vpack.c.b16 %v84, %v82
  %v115 = vpack.c.b16 %v85, %v83
  %v116 = vpack.c.b16 %v88, %v86
  %v117 = vpack.c.b16 %v89, %v87
  %v118 = vpack.c.b16 %v92, %v90
  %v119 = vpack.c.b16 %v93, %v91
  %v120 = vpack.c.b16 %v96, %v94
  %v121 = vpack.c.b16 %v97, %v95
  %v122 = vpack.c.b16 %v100, %v98
  %v123 = vpack.c.b16 %v101, %v99
  %v124 = vpack.c.b16 %v104, %v102
  %v125 = vpack.c.b16 %v105, %v103
  %v126 = vpack.c.b16 %v108, %v106
  %v127 = vpack.c.b16 %v109, %v107
  %v128 = vpack.c.b16 %v112, %v110
  %v129 = vpack.c.b16 %v113, %v111
  %v178 = vunpack.c.l.b16 %v30
  %v179 = vunpack.c.l.b16 %v31
  %v180 = vunpack.c.l.b16 %v32
  %v181 = vunpack.c.l.b16 %v33
  %v182 = vunpack.c.l.b16 %v34
  %v183 = vunpack.c.l.b16 %v35
  %v184 = vunpack.c.l.b16 %v36
  %v185 = vunpack.c.l.b16 %v37
  %v186 = vunpack.c.l.b16 %v38
  %v187 = vunpack.c.l.b16 %v39
  %v188 = vunpack.c.l.b16 %v40
  %v189 = vunpack.c.l.b16 %v41
  %v190 = vunpack.c.l.b16 %v42
  %v191 = vunpack.c.l.b16 %v43
  %v192 = vunpack.c.l.b16 %v44
  %v193 = vunpack.c.l.b16 %v45
  %v194 = vunpack.c.l.b16 %v46
  %v195 = vunpack.c.l.b16 %v47
  %v196 = vunpack.c.l.b16 %v48
  %v197 = vunpack.c.l.b16 %v49
  %v198 = vunpack.c.l.b16 %v50
  %v199 = vunpack.c.l.b16 %v51
  %v200 = vunpack.c.l.b16 %v52
  %v201 = vunpack.c.l.b16 %v53
  %v202 = vunpack.c.l.b16 %v54
  %v203 = vunpack.c.l.b16 %v55
  %v204 = vunpack.c.l.b16 %v56
  %v205 = vunpack.c.l.b16 %v57
  %v206 = vunpack.c.l.b16 %v58
  %v207 = vunpack.c.l.b16 %v59
  %v208 = vunpack.c.l.b16 %v60
  %v209 = vunpack.c.l.b16 %v61
  %v210 = vpack.c.b16 %v179, %v178
  %v211 = vpack.c.b16 %v181, %v180
  %v212 = vpack.c.b16 %v183, %v182
  %v213 = vpack.c.b16 %v185, %v184
  %v214 = vpack.c.b16 %v187, %v186
  %v215 = vpack.c.b16 %v189, %v188
  %v216 = vpack.c.b16 %v191, %v190
  %v217 = vpack.c.b16 %v193, %v192
  %v218 = vpack.c.b16 %v195, %v194
  %v219 = vpack.c.b16 %v197, %v196
  %v220 = vpack.c.b16 %v199, %v198
  %v221 = vpack.c.b16 %v201, %v200
  %v222 = vpack.c.b16 %v203, %v202
  %v223 = vpack.c.b16 %v205, %v204
  %v224 = vpack.c.b16 %v207, %v206
  %v225 = vpack.c.b16 %v209, %v208
  %242 = vmatpush.bf16.msra.mxu0 %v217
  %243 = vmatpush.bf16.msra.mxu0 %v216
  %244 = vmatpush.bf16.msra.mxu0 %v215
  %245 = vmatpush.bf16.msra.mxu0 %v214
  %246 = vmatpush.bf16.msra.mxu0 %v213
  %247 = vmatpush.bf16.msra.mxu0 %v212
  %248 = vmatpush.bf16.msra.mxu0 %v211
  %249 = vmatpush.bf16.msra.mxu0 %v210
  %250 = vmatmul.bf16.gmra.mxu0 %v114
  %v251 = vpop.f32.mrf.mxu0
  %v252 = vadd.f32 %v64, %v251
  %v253 = vpop.f32.mrf.mxu0
  %v254 = vadd.f32 %v64, %v253
  %255 = vmatmul.bf16.gmra.mxu0 %v116
  %v256 = vpop.f32.mrf.mxu0
  %v257 = vadd.f32 %v64, %v256
  %v258 = vpop.f32.mrf.mxu0
  %v259 = vadd.f32 %v64, %v258
  %260 = vmatmul.bf16.gmra.mxu0 %v118
  %v261 = vpop.f32.mrf.mxu0
  %v262 = vadd.f32 %v64, %v261
  %v263 = vpop.f32.mrf.mxu0
  %v264 = vadd.f32 %v64, %v263
  %265 = vmatmul.bf16.gmra.mxu0 %v120
  %v266 = vpop.f32.mrf.mxu0
  %v267 = vadd.f32 %v64, %v266
  %v268 = vpop.f32.mrf.mxu0
  %v269 = vadd.f32 %v64, %v268
  %270 = vmatmul.bf16.gmra.mxu0 %v122
  %v271 = vpop.f32.mrf.mxu0
  %v272 = vadd.f32 %v64, %v271
  %v273 = vpop.f32.mrf.mxu0
  %v274 = vadd.f32 %v64, %v273
  %275 = vmatmul.bf16.gmra.mxu0 %v124
  %v276 = vpop.f32.mrf.mxu0
  %v277 = vadd.f32 %v64, %v276
  %v278 = vpop.f32.mrf.mxu0
  %v279 = vadd.f32 %v64, %v278
  %280 = vmatmul.bf16.gmra.mxu0 %v126
  %v281 = vpop.f32.mrf.mxu0
  %v282 = vadd.f32 %v64, %v281
  %v283 = vpop.f32.mrf.mxu0
  %v284 = vadd.f32 %v64, %v283
  %285 = vmatmul.bf16.gmra.mxu0 %v128
  %v286 = vpop.f32.mrf.mxu0
  %v287 = vadd.f32 %v64, %v286
  %v288 = vpop.f32.mrf.mxu0
  %v289 = vadd.f32 %v64, %v288
  %290 = vdwg.mxu0
  %291 = vmatpush.bf16.msra.mxu0 %v225
  %292 = vmatpush.bf16.msra.mxu0 %v224
  %293 = vmatpush.bf16.msra.mxu0 %v223
  %294 = vmatpush.bf16.msra.mxu0 %v222
  %295 = vmatpush.bf16.msra.mxu0 %v221
  %296 = vmatpush.bf16.msra.mxu0 %v220
  %297 = vmatpush.bf16.msra.mxu0 %v219
  %298 = vmatpush.bf16.msra.mxu0 %v218
  %299 = vmatmul.bf16.gmra.mxu0 %v115
  %v300 = vpop.f32.mrf.mxu0
  %v301 = vadd.f32 %v252, %v300
  %v302 = vpop.f32.mrf.mxu0
  %v303 = vadd.f32 %v254, %v302
  %304 = vmatmul.bf16.gmra.mxu0 %v117
  %v305 = vpop.f32.mrf.mxu0
  %v306 = vadd.f32 %v257, %v305
  %v307 = vpop.f32.mrf.mxu0
  %v308 = vadd.f32 %v259, %v307
  %309 = vmatmul.bf16.gmra.mxu0 %v119
  %v310 = vpop.f32.mrf.mxu0
  %v311 = vadd.f32 %v262, %v310
  %v312 = vpop.f32.mrf.mxu0
  %v313 = vadd.f32 %v264, %v312
  %314 = vmatmul.bf16.gmra.mxu0 %v121
  %v315 = vpop.f32.mrf.mxu0
  %v316 = vadd.f32 %v267, %v315
  %v317 = vpop.f32.mrf.mxu0
  %v318 = vadd.f32 %v269, %v317
  %319 = vmatmul.bf16.gmra.mxu0 %v123
  %v320 = vpop.f32.mrf.mxu0
  %v321 = vadd.f32 %v272, %v320
  %v322 = vpop.f32.mrf.mxu0
  %v323 = vadd.f32 %v274, %v322
  %324 = vmatmul.bf16.gmra.mxu0 %v125
  %v325 = vpop.f32.mrf.mxu0
  %v326 = vadd.f32 %v277, %v325
  %v327 = vpop.f32.mrf.mxu0
  %v328 = vadd.f32 %v279, %v327
  %329 = vmatmul.bf16.gmra.mxu0 %v127
  %v330 = vpop.f32.mrf.mxu0
  %v331 = vadd.f32 %v282, %v330
  %v332 = vpop.f32.mrf.mxu0
  %v333 = vadd.f32 %v284, %v332
  %334 = vmatmul.bf16.gmra.mxu0 %v129
  %v335 = vpop.f32.mrf.mxu0
  %v336 = vadd.f32 %v287, %v335
  %v337 = vpop.f32.mrf.mxu0
  %v338 = vadd.f32 %v289, %v337
  %339 = vdwg.mxu0
  %vm340 = vcmp.gt.f32.partialorder %v301, 0.0
  %vm341 = vcmp.gt.f32.partialorder %v303, 0.0
  %vm342 = vcmp.gt.f32.partialorder %v306, 0.0
  %vm343 = vcmp.gt.f32.partialorder %v308, 0.0
  %vm344 = vcmp.gt.f32.partialorder %v311, 0.0
  %vm345 = vcmp.gt.f32.partialorder %v313, 0.0
  %vm346 = vcmp.gt.f32.partialorder %v316, 0.0
  %vm347 = vcmp.gt.f32.partialorder %v318, 0.0
  %vm348 = vcmp.gt.f32.partialorder %v321, 0.0
  %vm349 = vcmp.gt.f32.partialorder %v323, 0.0
  %vm350 = vcmp.gt.f32.partialorder %v326, 0.0
  %vm351 = vcmp.gt.f32.partialorder %v328, 0.0
  %vm352 = vcmp.gt.f32.partialorder %v331, 0.0
  %vm353 = vcmp.gt.f32.partialorder %v333, 0.0
  %vm354 = vcmp.gt.f32.partialorder %v336, 0.0
  %vm355 = vcmp.gt.f32.partialorder %v338, 0.0
  %v356 = vmul.f32 %v301, 0.01
  %v357 = vmul.f32 %v303, 0.01
  %v358 = vmul.f32 %v306, 0.01
  %v359 = vmul.f32 %v308, 0.01
  %v360 = vmul.f32 %v311, 0.01
  %v361 = vmul.f32 %v313, 0.01
  %v362 = vmul.f32 %v316, 0.01
  %v363 = vmul.f32 %v318, 0.01
  %v364 = vmul.f32 %v321, 0.01
  %v365 = vmul.f32 %v323, 0.01
  %v366 = vmul.f32 %v326, 0.01
  %v367 = vmul.f32 %v328, 0.01
  %v368 = vmul.f32 %v331, 0.01
  %v369 = vmul.f32 %v333, 0.01
  %v370 = vmul.f32 %v336, 0.01
  %v371 = vmul.f32 %v338, 0.01
  %v372 = vsel %vm340, %v301, %v356
  %v373 = vsel %vm341, %v303, %v357
  %v374 = vsel %vm342, %v306, %v358
  %v375 = vsel %vm343, %v308, %v359
  %v376 = vsel %vm344, %v311, %v360
  %v377 = vsel %vm345, %v313, %v361
  %v378 = vsel %vm346, %v316, %v362
  %v379 = vsel %vm347, %v318, %v363
  %v380 = vsel %vm348, %v321, %v364
  %v381 = vsel %vm349, %v323, %v365
  %v382 = vsel %vm350, %v326, %v366
  %v383 = vsel %vm351, %v328, %v367
  %v384 = vsel %vm352, %v331, %v368
  %v385 = vsel %vm353, %v333, %v369
  %v386 = vsel %vm354, %v336, %v370
  %v387 = vsel %vm355, %v338, %v371
  %388 = vst [vmem:[%s3] sm:$0xff] %v372
  %389 = vst [vmem:[%s3 + $0x8] sm:$0xff] %v373
  %390 = vst [vmem:[%s3 + $0x10] sm:$0xff] %v374
  %391 = vst [vmem:[%s3 + $0x18] sm:$0xff] %v375
  %392 = vst [vmem:[%s3 + $0x20] sm:$0xff] %v376
  %393 = vst [vmem:[%s3 + $0x28] sm:$0xff] %v377
  %394 = vst [vmem:[%s3 + $0x30] sm:$0xff] %v378
  %395 = vst [vmem:[%s3 + $0x38] sm:$0xff] %v379
  %396 = vst [vmem:[%s3 + $0x40] sm:$0xff] %v380
  %397 = vst [vmem:[%s3 + $0x48] sm:$0xff] %v381
  %398 = vst [vmem:[%s3 + $0x50] sm:$0xff] %v382
  %399 = vst [vmem:[%s3 + $0x58] sm:$0xff] %v383
  %400 = vst [vmem:[%s3 + $0x60] sm:$0xff] %v384
  %401 = vst [vmem:[%s3 + $0x68] sm:$0xff] %v385
  %402 = vst [vmem:[%s3 + $0x70] sm:$0xff] %v386
  %403 = vst [vmem:[%s3 + $0x78] sm:$0xff] %v387
  // Predicated region
  $region14: #{discriminator_dc_forward.5} parent=0 // pred_check
    _
  $region15: #{discriminator_dc_forward.5} parent=0 // pred_check_branch
    %405 = sbr.rel (0) target = $region17
  $region16: #{discriminator_dc_forward.5} parent=0 // pred_region
    _
  $region17: #{discriminator_dc_forward.5} parent=0 // pred_fallthru
    _
  // Predicated region
  $region18: #{discriminator_dc_forward.5} parent=0 // pred_check
    _
  $region19: #{discriminator_dc_forward.5} parent=0 // pred_check_branch
    %407 = sbr.rel (0) target = $region21
  $region20: #{discriminator_dc_forward.5} parent=0 // pred_region
    _
  $region21: #{discriminator_dc_forward.5} parent=0 // pred_fallthru
    _

// kernel: discriminator_dc_forward.7
$region0: #{discriminator_dc_forward.7}
  #allocation0 [shape = 'u32[]', space=smem, size = 0x4, offset = 0x4, fixed_abs, tag = 'smem constant byte address 0x4 - core index']
  #allocation1 [shape = 'u32[72,128]{1,0:T(1,128)}', space=vmem, size = 0x9000, scoped, tag = 'internal scratch']
  %s0 = inlined_call_operand.vmem [shape: bf16[2,512], index: 0, kind: input, shape index: {}]
  %s1 = inlined_call_operand.vmem [shape: bf16[512,128], index: 1, kind: input, shape index: {}]
  %s2 = inlined_call_operand.vmem [shape: f32[1,128], index: 2, kind: input, shape index: {}]
  %s3 = inlined_call_operand.hbm [shape: f32[2,128], index: 3, kind: output, shape index: {}]
  %s4 = sld [smem:[#allocation0]]
  $region22: #{discriminator_dc_forward.7} parent=0
    _
  %s6 = ssub.s32 1, %s4
  %s7 = scalar_select 0, %s6, %s4
  $region1: #{discriminator_dc_forward.7} parent=0
    #allocation2 [shape = 'u8[1024]{0}', space=vmem, size = 0x400, scoped, tag = 'output window, operand 0, single buffered']
    #allocation3 [shape = 's32[1]{0}', space=sflag, size = 0x4, scoped, tag = 'scoped memory for discriminator_dc_forward.7']
    %8 = vsyncpa [#allocation3], 0
    // Predicated region
    $region2: #{discriminator_dc_forward.7} parent=1 // pred_check
      _
    $region3: #{discriminator_dc_forward.7} parent=1 // pred_check_branch
      %10 = sbr.rel (0) target = $region5
    $region4: #{discriminator_dc_forward.7} parent=1 // pred_region
      _
    $region5: #{discriminator_dc_forward.7} parent=1 // pred_fallthru
      _
    // Predicated region
    $region6: #{discriminator_dc_forward.7} parent=1 // pred_check
      _
    $region7: #{discriminator_dc_forward.7} parent=1 // pred_check_branch
      %12 = sbr.rel (0) target = $region9
    $region8: #{discriminator_dc_forward.7} parent=1 // pred_region
      _
    $region9: #{discriminator_dc_forward.7} parent=1 // pred_fallthru
      _
    // Predicated region
    $region10: #{discriminator_dc_forward.7} parent=1 // pred_check
      _
    $region11: #{discriminator_dc_forward.7} parent=1 // pred_check_branch
      %14 = sbr.rel (0) target = $region13
    $region12: #{discriminator_dc_forward.7} parent=1 // pred_region
      _
    $region13: #{discriminator_dc_forward.7} parent=1 // pred_fallthru
      _
    %v15 = vld [vmem:[%s0] sm:$0xf]
    %v16 = vld [vmem:[%s1] sm:$0xf]
    %v17 = vld [vmem:[%s1 + $0x4] sm:$0xf]
    %v18 = vld [vmem:[%s1 + $0x8] sm:$0xf]
    %v19 = vld [vmem:[%s1 + $0xc] sm:$0xf]
    %v20 = vld [vmem:[%s1 + $0x10] sm:$0xf]
    %v21 = vld [vmem:[%s1 + $0x14] sm:$0xf]
    %v22 = vld [vmem:[%s1 + $0x18] sm:$0xf]
    %v23 = vld [vmem:[%s1 + $0x1c] sm:$0xf]
    %v24 = vld [vmem:[%s1 + $0x20] sm:$0xf]
    %v25 = vld [vmem:[%s1 + $0x24] sm:$0xf]
    %v26 = vld [vmem:[%s1 + $0x28] sm:$0xf]
    %v27 = vld [vmem:[%s1 + $0x2c] sm:$0xf]
    %v28 = vld [vmem:[%s1 + $0x30] sm:$0xf]
    %v29 = vld [vmem:[%s1 + $0x34] sm:$0xf]
    %v30 = vld [vmem:[%s1 + $0x38] sm:$0xf]
    %v31 = vld [vmem:[%s1 + $0x3c] sm:$0xf]
    %v32 = vld [vmem:[%s1 + $0x40] sm:$0xf]
    %v33 = vld [vmem:[%s1 + $0x44] sm:$0xf]
    %v34 = vld [vmem:[%s1 + $0x48] sm:$0xf]
    %v35 = vld [vmem:[%s1 + $0x4c] sm:$0xf]
    %v36 = vld [vmem:[%s1 + $0x50] sm:$0xf]
    %v37 = vld [vmem:[%s1 + $0x54] sm:$0xf]
    %v38 = vld [vmem:[%s1 + $0x58] sm:$0xf]
    %v39 = vld [vmem:[%s1 + $0x5c] sm:$0xf]
    %v40 = vld [vmem:[%s1 + $0x60] sm:$0xf]
    %v41 = vld [vmem:[%s1 + $0x64] sm:$0xf]
    %v42 = vld [vmem:[%s1 + $0x68] sm:$0xf]
    %v43 = vld [vmem:[%s1 + $0x6c] sm:$0xf]
    %v44 = vld [vmem:[%s1 + $0x70] sm:$0xf]
    %v45 = vld [vmem:[%s1 + $0x74] sm:$0xf]
    %v46 = vld [vmem:[%s1 + $0x78] sm:$0xf]
    %v47 = vld [vmem:[%s1 + $0x7c] sm:$0xf]
    %v48 = vld [vmem:[%s1 + $0x80] sm:$0xf]
    %v49 = vld [vmem:[%s1 + $0x84] sm:$0xf]
    %v50 = vld [vmem:[%s1 + $0x88] sm:$0xf]
    %v51 = vld [vmem:[%s1 + $0x8c] sm:$0xf]
    %v52 = vld [vmem:[%s1 + $0x90] sm:$0xf]
    %v53 = vld [vmem:[%s1 + $0x94] sm:$0xf]
    %v54 = vld [vmem:[%s1 + $0x98] sm:$0xf]
    %v55 = vld [vmem:[%s1 + $0x9c] sm:$0xf]
    %v56 = vld [vmem:[%s1 + $0xa0] sm:$0xf]
    %v57 = vld [vmem:[%s1 + $0xa4] sm:$0xf]
    %v58 = vld [vmem:[%s1 + $0xa8] sm:$0xf]
    %v59 = vld [vmem:[%s1 + $0xac] sm:$0xf]
    %v60 = vld [vmem:[%s1 + $0xb0] sm:$0xf]
    %v61 = vld [vmem:[%s1 + $0xb4] sm:$0xf]
    %v62 = vld [vmem:[%s1 + $0xb8] sm:$0xf]
    %v63 = vld [vmem:[%s1 + $0xbc] sm:$0xf]
    %v64 = vld [vmem:[%s1 + $0xc0] sm:$0xf]
    %v65 = vld [vmem:[%s1 + $0xc4] sm:$0xf]
    %v66 = vld [vmem:[%s1 + $0xc8] sm:$0xf]
    %v67 = vld [vmem:[%s1 + $0xcc] sm:$0xf]
    %v68 = vld [vmem:[%s1 + $0xd0] sm:$0xf]
    %v69 = vld [vmem:[%s1 + $0xd4] sm:$0xf]
    %v70 = vld [vmem:[%s1 + $0xd8] sm:$0xf]
    %v71 = vld [vmem:[%s1 + $0xdc] sm:$0xf]
    %v72 = vld [vmem:[%s1 + $0xe0] sm:$0xf]
    %v73 = vld [vmem:[%s1 + $0xe4] sm:$0xf]
    %v74 = vld [vmem:[%s1 + $0xe8] sm:$0xf]
    %v75 = vld [vmem:[%s1 + $0xec] sm:$0xf]
    %v76 = vld [vmem:[%s1 + $0xf0] sm:$0xf]
    %v77 = vld [vmem:[%s1 + $0xf4] sm:$0xf]
    %v78 = vld [vmem:[%s1 + $0xf8] sm:$0xf]
    %v79 = vld [vmem:[%s1 + $0xfc] sm:$0xf]
    %v80 = vld [vmem:[%s2] sm:$0x1]
    %v82 = vperm.slane %v80, 0
    %85 = vst [vmem:[#allocation1] ss:$9 sm:$0xff] %v15
    %v86 = vld [vmem:[#allocation1] sm:$0xff]
    %v87 = vld [vmem:[#allocation1 + $0x9] sm:$0xff]
    %v88 = vld [vmem:[#allocation1 + $0x12] sm:$0xff]
    %v89 = vld [vmem:[#allocation1 + $0x1b] sm:$0xff]
    %v158 = vunpack.c.l.b16 %v16
    %v159 = vunpack.c.l.b16 %v17
    %v160 = vunpack.c.l.b16 %v18
    %v161 = vunpack.c.l.b16 %v19
    %v162 = vunpack.c.l.b16 %v20
    %v163 = vunpack.c.l.b16 %v21
    %v164 = vunpack.c.l.b16 %v22
    %v165 = vunpack.c.l.b16 %v23
    %v166 = vunpack.c.l.b16 %v24
    %v167 = vunpack.c.l.b16 %v25
    %v168 = vunpack.c.l.b16 %v26
    %v169 = vunpack.c.l.b16 %v27
    %v170 = vunpack.c.l.b16 %v28
    %v171 = vunpack.c.l.b16 %v29
    %v172 = vunpack.c.l.b16 %v30
    %v173 = vunpack.c.l.b16 %v31
    %v174 = vunpack.c.l.b16 %v32
    %v175 = vunpack.c.l.b16 %v33
    %v176 = vunpack.c.l.b16 %v34
    %v177 = vunpack.c.l.b16 %v35
    %v178 = vunpack.c.l.b16 %v36
    %v179 = vunpack.c.l.b16 %v37
    %v180 = vunpack.c.l.b16 %v38
    %v181 = vunpack.c.l.b16 %v39
    %v182 = vunpack.c.l.b16 %v40
    %v183 = vunpack.c.l.b16 %v41
    %v184 = vunpack.c.l.b16 %v42
    %v185 = vunpack.c.l.b16 %v43
    %v186 = vunpack.c.l.b16 %v44
    %v187 = vunpack.c.l.b16 %v45
    %v188 = vunpack.c.l.b16 %v46
    %v189 = vunpack.c.l.b16 %v47
    %v190 = vunpack.c.l.b16 %v48
    %v191 = vunpack.c.l.b16 %v49
    %v192 = vunpack.c.l.b16 %v50
    %v193 = vunpack.c.l.b16 %v51
    %v194 = vunpack.c.l.b16 %v52
    %v195 = vunpack.c.l.b16 %v53
    %v196 = vunpack.c.l.b16 %v54
    %v197 = vunpack.c.l.b16 %v55
    %v198 = vunpack.c.l.b16 %v56
    %v199 = vunpack.c.l.b16 %v57
    %v200 = vunpack.c.l.b16 %v58
    %v201 = vunpack.c.l.b16 %v59
    %v202 = vunpack.c.l.b16 %v60
    %v203 = vunpack.c.l.b16 %v61
    %v204 = vunpack.c.l.b16 %v62
    %v205 = vunpack.c.l.b16 %v63
    %v206 = vunpack.c.l.b16 %v64
    %v207 = vunpack.c.l.b16 %v65
    %v208 = vunpack.c.l.b16 %v66
    %v209 = vunpack.c.l.b16 %v67
    %v210 = vunpack.c.l.b16 %v68
    %v211 = vunpack.c.l.b16 %v69
    %v212 = vunpack.c.l.b16 %v70
    %v213 = vunpack.c.l.b16 %v71
    %v214 = vunpack.c.l.b16 %v72
    %v215 = vunpack.c.l.b16 %v73
    %v216 = vunpack.c.l.b16 %v74
    %v217 = vunpack.c.l.b16 %v75
    %v218 = vunpack.c.l.b16 %v76
    %v219 = vunpack.c.l.b16 %v77
    %v220 = vunpack.c.l.b16 %v78
    %v221 = vunpack.c.l.b16 %v79
    %v222 = vpack.c.b16 %v159, %v158
    %v223 = vpack.c.b16 %v161, %v160
    %v224 = vpack.c.b16 %v163, %v162
    %v225 = vpack.c.b16 %v165, %v164
    %v226 = vpack.c.b16 %v167, %v166
    %v227 = vpack.c.b16 %v169, %v168
    %v228 = vpack.c.b16 %v171, %v170
    %v229 = vpack.c.b16 %v173, %v172
    %v230 = vpack.c.b16 %v175, %v174
    %v231 = vpack.c.b16 %v177, %v176
    %v232 = vpack.c.b16 %v179, %v178
    %v233 = vpack.c.b16 %v181, %v180
    %v234 = vpack.c.b16 %v183, %v182
    %v235 = vpack.c.b16 %v185, %v184
    %v236 = vpack.c.b16 %v187, %v186
    %v237 = vpack.c.b16 %v189, %v188
    %v238 = vpack.c.b16 %v191, %v190
    %v239 = vpack.c.b16 %v193, %v192
    %v240 = vpack.c.b16 %v195, %v194
    %v241 = vpack.c.b16 %v197, %v196
    %v242 = vpack.c.b16 %v199, %v198
    %v243 = vpack.c.b16 %v201, %v200
    %v244 = vpack.c.b16 %v203, %v202
    %v245 = vpack.c.b16 %v205, %v204
    %v246 = vpack.c.b16 %v207, %v206
    %v247 = vpack.c.b16 %v209, %v208
    %v248 = vpack.c.b16 %v211, %v210
    %v249 = vpack.c.b16 %v213, %v212
    %v250 = vpack.c.b16 %v215, %v214
    %v251 = vpack.c.b16 %v217, %v216
    %v252 = vpack.c.b16 %v219, %v218
    %v253 = vpack.c.b16 %v221, %v220
    %286 = vmatpush.bf16.msra.mxu0 %v229
    %287 = vmatpush.bf16.msra.mxu0 %v228
    %288 = vmatpush.bf16.msra.mxu0 %v227
    %289 = vmatpush.bf16.msra.mxu0 %v226
    %290 = vmatpush.bf16.msra.mxu0 %v225
    %291 = vmatpush.bf16.msra.mxu0 %v224
    %292 = vmatpush.bf16.msra.mxu0 %v223
    %293 = vmatpush.bf16.msra.mxu0 %v222
    %294 = vmatmul.bf16.gmra.mxu0 %v86
    %v295 = vpop.f32.mrf.mxu0
    %v296 = vadd.f32 %v82, %v295
    %v297 = vpop.f32.mrf.mxu0
    %298 = vdwg.mxu0
    %299 = vmatpush.bf16.msra.mxu0 %v237
    %300 = vmatpush.bf16.msra.mxu0 %v236
    %301 = vmatpush.bf16.msra.mxu0 %v235
    %302 = vmatpush.bf16.msra.mxu0 %v234
    %303 = vmatpush.bf16.msra.mxu0 %v233
    %304 = vmatpush.bf16.msra.mxu0 %v232
    %305 = vmatpush.bf16.msra.mxu0 %v231
    %306 = vmatpush.bf16.msra.mxu0 %v230
    %307 = vmatmul.bf16.gmra.mxu0 %v87
    %v308 = vpop.f32.mrf.mxu0
    %v309 = vadd.f32 %v296, %v308
    %v310 = vpop.f32.mrf.mxu0
    %311 = vdwg.mxu0
    %312 = vmatpush.bf16.msra.mxu0 %v245
    %313 = vmatpush.bf16.msra.mxu0 %v244
    %314 = vmatpush.bf16.msra.mxu0 %v243
    %315 = vmatpush.bf16.msra.mxu0 %v242
    %316 = vmatpush.bf16.msra.mxu0 %v241
    %317 = vmatpush.bf16.msra.mxu0 %v240
    %318 = vmatpush.bf16.msra.mxu0 %v239
    %319 = vmatpush.bf16.msra.mxu0 %v238
    %320 = vmatmul.bf16.gmra.mxu0 %v88
    %v321 = vpop.f32.mrf.mxu0
    %v322 = vadd.f32 %v309, %v321
    %v323 = vpop.f32.mrf.mxu0
    %324 = vdwg.mxu0
    %325 = vmatpush.bf16.msra.mxu0 %v253
    %326 = vmatpush.bf16.msra.mxu0 %v252
    %327 = vmatpush.bf16.msra.mxu0 %v251
    %328 = vmatpush.bf16.msra.mxu0 %v250
    %329 = vmatpush.bf16.msra.mxu0 %v249
    %330 = vmatpush.bf16.msra.mxu0 %v248
    %331 = vmatpush.bf16.msra.mxu0 %v247
    %332 = vmatpush.bf16.msra.mxu0 %v246
    %333 = vmatmul.bf16.gmra.mxu0 %v89
    %v334 = vpop.f32.mrf.mxu0
    %v335 = vadd.f32 %v322, %v334
    %v336 = vpop.f32.mrf.mxu0
    %337 = vdwg.mxu0
    %338 = vst [vmem:[#allocation2] sm:$0x3] %v335
    // Predicated region
    $region14: #{discriminator_dc_forward.7} parent=1 // pred_check
      _
    $region15: #{discriminator_dc_forward.7} parent=1 // pred_check_branch
      %340 = sbr.rel (0) target = $region17
    $region16: #{discriminator_dc_forward.7} parent=1 // pred_region
      %342 = vsyncadd [#allocation3], 0
      %s344 = sshll.u32 [#allocation2], 4
      %s345 = int_to_ptr.vmem [resolvable:$true] %s344
      %s346 = sshll.u32 %s3, 4
      %s347 = int_to_ptr.hbm [resolvable:$true] %s346
      %349 = dma.vmem_to_hbm [thread:$0]  %s345, 32, %s347, [#allocation3]
    $region17: #{discriminator_dc_forward.7} parent=1 // pred_fallthru
      _
    // Predicated region
    $region18: #{discriminator_dc_forward.7} parent=1 // pred_check
      _
    $region19: #{discriminator_dc_forward.7} parent=1 // pred_check_branch
      %351 = sbr.rel (0) target = $region21
    $region20: #{discriminator_dc_forward.7} parent=1 // pred_region
      %353 = dma.done [#allocation3], 32
    $region21: #{discriminator_dc_forward.7} parent=1 // pred_fallthru
      _
    %354 = vsyncpa [#allocation3], 1

// kernel: discriminator_dc_forward.6
$region0: #{discriminator_dc_forward.6}
  #allocation0 [shape = 'u32[]', space=smem, size = 0x4, offset = 0x4, fixed_abs, tag = 'smem constant byte address 0x4 - core index']
  #allocation1 [shape = 'u32[72,128]{1,0:T(1,128)}', space=vmem, size = 0x9000, scoped, tag = 'internal scratch']
  %s0 = inlined_call_operand.vmem [shape: bf16[128,256], index: 0, kind: input, shape index: {}]
  %s1 = inlined_call_operand.vmem [shape: bf16[256,128], index: 1, kind: input, shape index: {}]
  %s2 = inlined_call_operand.vmem [shape: f32[1,128], index: 2, kind: input, shape index: {}]
  %s3 = inlined_call_operand.vmem [shape: f32[128,128], index: 3, kind: output, shape index: {}]
  %s4 = sld [smem:[#allocation0]]
  $region22: #{discriminator_dc_forward.6} parent=0
    _
  %s6 = ssub.s32 1, %s4
  %s7 = scalar_select 0, %s6, %s4
  // Predicated region
  $region2: #{discriminator_dc_forward.6} parent=0 // pred_check
    _
  $region3: #{discriminator_dc_forward.6} parent=0 // pred_check_branch
    %9 = sbr.rel (0) target = $region5
  $region4: #{discriminator_dc_forward.6} parent=0 // pred_region
    _
  $region5: #{discriminator_dc_forward.6} parent=0 // pred_fallthru
    _
  // Predicated region
  $region6: #{discriminator_dc_forward.6} parent=0 // pred_check
    _
  $region7: #{discriminator_dc_forward.6} parent=0 // pred_check_branch
    %11 = sbr.rel (0) target = $region9
  $region8: #{discriminator_dc_forward.6} parent=0 // pred_region
    _
  $region9: #{discriminator_dc_forward.6} parent=0 // pred_fallthru
    _
  // Predicated region
  $region10: #{discriminator_dc_forward.6} parent=0 // pred_check
    _
  $region11: #{discriminator_dc_forward.6} parent=0 // pred_check_branch
    %13 = sbr.rel (0) target = $region13
  $region12: #{discriminator_dc_forward.6} parent=0 // pred_region
    _
  $region13: #{discriminator_dc_forward.6} parent=0 // pred_fallthru
    _
  %v14 = vld [vmem:[%s0] sm:$0xff]
  %v15 = vld [vmem:[%s0 + $0x8] sm:$0xff]
  %v16 = vld [vmem:[%s0 + $0x10] sm:$0xff]
  %v17 = vld [vmem:[%s0 + $0x18] sm:$0xff]
  %v18 = vld [vmem:[%s0 + $0x20] sm:$0xff]
  %v19 = vld [vmem:[%s0 + $0x28] sm:$0xff]
  %v20 = vld [vmem:[%s0 + $0x30] sm:$0xff]
  %v21 = vld [vmem:[%s0 + $0x38] sm:$0xff]
  %v22 = vld [vmem:[%s0 + $0x40] sm:$0xff]
  %v23 = vld [vmem:[%s0 + $0x48] sm:$0xff]
  %v24 = vld [vmem:[%s0 + $0x50] sm:$0xff]
  %v25 = vld [vmem:[%s0 + $0x58] sm:$0xff]
  %v26 = vld [vmem:[%s0 + $0x60] sm:$0xff]
  %v27 = vld [vmem:[%s0 + $0x68] sm:$0xff]
  %v28 = vld [vmem:[%s0 + $0x70] sm:$0xff]
  %v29 = vld [vmem:[%s0 + $0x78] sm:$0xff]
  %v30 = vld [vmem:[%s1] sm:$0xf]
  %v31 = vld [vmem:[%s1 + $0x4] sm:$0xf]
  %v32 = vld [vmem:[%s1 + $0x8] sm:$0xf]
  %v33 = vld [vmem:[%s1 + $0xc] sm:$0xf]
  %v34 = vld [vmem:[%s1 + $0x10] sm:$0xf]
  %v35 = vld [vmem:[%s1 + $0x14] sm:$0xf]
  %v36 = vld [vmem:[%s1 + $0x18] sm:$0xf]
  %v37 = vld [vmem:[%s1 + $0x1c] sm:$0xf]
  %v38 = vld [vmem:[%s1 + $0x20] sm:$0xf]
  %v39 = vld [vmem:[%s1 + $0x24] sm:$0xf]
  %v40 = vld [vmem:[%s1 + $0x28] sm:$0xf]
  %v41 = vld [vmem:[%s1 + $0x2c] sm:$0xf]
  %v42 = vld [vmem:[%s1 + $0x30] sm:$0xf]
  %v43 = vld [vmem:[%s1 + $0x34] sm:$0xf]
  %v44 = vld [vmem:[%s1 + $0x38] sm:$0xf]
  %v45 = vld [vmem:[%s1 + $0x3c] sm:$0xf]
  %v46 = vld [vmem:[%s1 + $0x40] sm:$0xf]
  %v47 = vld [vmem:[%s1 + $0x44] sm:$0xf]
  %v48 = vld [vmem:[%s1 + $0x48] sm:$0xf]
  %v49 = vld [vmem:[%s1 + $0x4c] sm:$0xf]
  %v50 = vld [vmem:[%s1 + $0x50] sm:$0xf]
  %v51 = vld [vmem:[%s1 + $0x54] sm:$0xf]
  %v52 = vld [vmem:[%s1 + $0x58] sm:$0xf]
  %v53 = vld [vmem:[%s1 + $0x5c] sm:$0xf]
  %v54 = vld [vmem:[%s1 + $0x60] sm:$0xf]
  %v55 = vld [vmem:[%s1 + $0x64] sm:$0xf]
  %v56 = vld [vmem:[%s1 + $0x68] sm:$0xf]
  %v57 = vld [vmem:[%s1 + $0x6c] sm:$0xf]
  %v58 = vld [vmem:[%s1 + $0x70] sm:$0xf]
  %v59 = vld [vmem:[%s1 + $0x74] sm:$0xf]
  %v60 = vld [vmem:[%s1 + $0x78] sm:$0xf]
  %v61 = vld [vmem:[%s1 + $0x7c] sm:$0xf]
  %v62 = vld [vmem:[%s2] sm:$0x1]
  %v64 = vperm.slane %v62, 0
  %v82 = vunpack.c.l.b16 %v14
  %v83 = vunpack.c.h.b16 %v14
  %v84 = vunpack.c.l.b16 %v15
  %v85 = vunpack.c.h.b16 %v15
  %v86 = vunpack.c.l.b16 %v16
  %v87 = vunpack.c.h.b16 %v16
  %v88 = vunpack.c.l.b16 %v17
  %v89 = vunpack.c.h.b16 %v17
  %v90 = vunpack.c.l.b16 %v18
  %v91 = vunpack.c.h.b16 %v18
  %v92 = vunpack.c.l.b16 %v19
  %v93 = vunpack.c.h.b16 %v19
  %v94 = vunpack.c.l.b16 %v20
  %v95 = vunpack.c.h.b16 %v20
  %v96 = vunpack.c.l.b16 %v21
  %v97 = vunpack.c.h.b16 %v21
  %v98 = vunpack.c.l.b16 %v22
  %v99 = vunpack.c.h.b16 %v22
  %v100 = vunpack.c.l.b16 %v23
  %v101 = vunpack.c.h.b16 %v23
  %v102 = vunpack.c.l.b16 %v24
  %v103 = vunpack.c.h.b16 %v24
  %v104 = vunpack.c.l.b16 %v25
  %v105 = vunpack.c.h.b16 %v25
  %v106 = vunpack.c.l.b16 %v26
  %v107 = vunpack.c.h.b16 %v26
  %v108 = vunpack.c.l.b16 %v27
  %v109 = vunpack.c.h.b16 %v27
  %v110 = vunpack.c.l.b16 %v28
  %v111 = vunpack.c.h.b16 %v28
  %v112 = vunpack.c.l.b16 %v29
  %v113 = vunpack.c.h.b16 %v29
  %v114 = vpack.c.b16 %v84, %v82
  %v115 = vpack.c.b16 %v85, %v83
  %v116 = vpack.c.b16 %v88, %v86
  %v117 = vpack.c.b16 %v89, %v87
  %v118 = vpack.c.b16 %v92, %v90
  %v119 = vpack.c.b16 %v93, %v91
  %v120 = vpack.c.b16 %v96, %v94
  %v121 = vpack.c.b16 %v97, %v95
  %v122 = vpack.c.b16 %v100, %v98
  %v123 = vpack.c.b16 %v101, %v99
  %v124 = vpack.c.b16 %v104, %v102
  %v125 = vpack.c.b16 %v105, %v103
  %v126 = vpack.c.b16 %v108, %v106
  %v127 = vpack.c.b16 %v109, %v107
  %v128 = vpack.c.b16 %v112, %v110
  %v129 = vpack.c.b16 %v113, %v111
  %v178 = vunpack.c.l.b16 %v30
  %v179 = vunpack.c.l.b16 %v31
  %v180 = vunpack.c.l.b16 %v32
  %v181 = vunpack.c.l.b16 %v33
  %v182 = vunpack.c.l.b16 %v34
  %v183 = vunpack.c.l.b16 %v35
  %v184 = vunpack.c.l.b16 %v36
  %v185 = vunpack.c.l.b16 %v37
  %v186 = vunpack.c.l.b16 %v38
  %v187 = vunpack.c.l.b16 %v39
  %v188 = vunpack.c.l.b16 %v40
  %v189 = vunpack.c.l.b16 %v41
  %v190 = vunpack.c.l.b16 %v42
  %v191 = vunpack.c.l.b16 %v43
  %v192 = vunpack.c.l.b16 %v44
  %v193 = vunpack.c.l.b16 %v45
  %v194 = vunpack.c.l.b16 %v46
  %v195 = vunpack.c.l.b16 %v47
  %v196 = vunpack.c.l.b16 %v48
  %v197 = vunpack.c.l.b16 %v49
  %v198 = vunpack.c.l.b16 %v50
  %v199 = vunpack.c.l.b16 %v51
  %v200 = vunpack.c.l.b16 %v52
  %v201 = vunpack.c.l.b16 %v53
  %v202 = vunpack.c.l.b16 %v54
  %v203 = vunpack.c.l.b16 %v55
  %v204 = vunpack.c.l.b16 %v56
  %v205 = vunpack.c.l.b16 %v57
  %v206 = vunpack.c.l.b16 %v58
  %v207 = vunpack.c.l.b16 %v59
  %v208 = vunpack.c.l.b16 %v60
  %v209 = vunpack.c.l.b16 %v61
  %v210 = vpack.c.b16 %v179, %v178
  %v211 = vpack.c.b16 %v181, %v180
  %v212 = vpack.c.b16 %v183, %v182
  %v213 = vpack.c.b16 %v185, %v184
  %v214 = vpack.c.b16 %v187, %v186
  %v215 = vpack.c.b16 %v189, %v188
  %v216 = vpack.c.b16 %v191, %v190
  %v217 = vpack.c.b16 %v193, %v192
  %v218 = vpack.c.b16 %v195, %v194
  %v219 = vpack.c.b16 %v197, %v196
  %v220 = vpack.c.b16 %v199, %v198
  %v221 = vpack.c.b16 %v201, %v200
  %v222 = vpack.c.b16 %v203, %v202
  %v223 = vpack.c.b16 %v205, %v204
  %v224 = vpack.c.b16 %v207, %v206
  %v225 = vpack.c.b16 %v209, %v208
  %242 = vmatpush.bf16.msra.mxu0 %v217
  %243 = vmatpush.bf16.msra.mxu0 %v216
  %244 = vmatpush.bf16.msra.mxu0 %v215
  %245 = vmatpush.bf16.msra.mxu0 %v214
  %246 = vmatpush.bf16.msra.mxu0 %v213
  %247 = vmatpush.bf16.msra.mxu0 %v212
  %248 = vmatpush.bf16.msra.mxu0 %v211
  %249 = vmatpush.bf16.msra.mxu0 %v210
  %250 = vmatmul.bf16.gmra.mxu0 %v114
  %v251 = vpop.f32.mrf.mxu0
  %v252 = vadd.f32 %v64, %v251
  %v253 = vpop.f32.mrf.mxu0
  %v254 = vadd.f32 %v64, %v253
  %255 = vmatmul.bf16.gmra.mxu0 %v116
  %v256 = vpop.f32.mrf.mxu0
  %v257 = vadd.f32 %v64, %v256
  %v258 = vpop.f32.mrf.mxu0
  %v259 = vadd.f32 %v64, %v258
  %260 = vmatmul.bf16.gmra.mxu0 %v118
  %v261 = vpop.f32.mrf.mxu0
  %v262 = vadd.f32 %v64, %v261
  %v263 = vpop.f32.mrf.mxu0
  %v264 = vadd.f32 %v64, %v263
  %265 = vmatmul.bf16.gmra.mxu0 %v120
  %v266 = vpop.f32.mrf.mxu0
  %v267 = vadd.f32 %v64, %v266
  %v268 = vpop.f32.mrf.mxu0
  %v269 = vadd.f32 %v64, %v268
  %270 = vmatmul.bf16.gmra.mxu0 %v122
  %v271 = vpop.f32.mrf.mxu0
  %v272 = vadd.f32 %v64, %v271
  %v273 = vpop.f32.mrf.mxu0
  %v274 = vadd.f32 %v64, %v273
  %275 = vmatmul.bf16.gmra.mxu0 %v124
  %v276 = vpop.f32.mrf.mxu0
  %v277 = vadd.f32 %v64, %v276
  %v278 = vpop.f32.mrf.mxu0
  %v279 = vadd.f32 %v64, %v278
  %280 = vmatmul.bf16.gmra.mxu0 %v126
  %v281 = vpop.f32.mrf.mxu0
  %v282 = vadd.f32 %v64, %v281
  %v283 = vpop.f32.mrf.mxu0
  %v284 = vadd.f32 %v64, %v283
  %285 = vmatmul.bf16.gmra.mxu0 %v128
  %v286 = vpop.f32.mrf.mxu0
  %v287 = vadd.f32 %v64, %v286
  %v288 = vpop.f32.mrf.mxu0
  %v289 = vadd.f32 %v64, %v288
  %290 = vdwg.mxu0
  %291 = vmatpush.bf16.msra.mxu0 %v225
  %292 = vmatpush.bf16.msra.mxu0 %v224
  %293 = vmatpush.bf16.msra.mxu0 %v223
  %294 = vmatpush.bf16.msra.mxu0 %v222
  %295 = vmatpush.bf16.msra.mxu0 %v221
  %296 = vmatpush.bf16.msra.mxu0 %v220
  %297 = vmatpush.bf16.msra.mxu0 %v219
  %298 = vmatpush.bf16.msra.mxu0 %v218
  %299 = vmatmul.bf16.gmra.mxu0 %v115
  %v300 = vpop.f32.mrf.mxu0
  %v301 = vadd.f32 %v252, %v300
  %v302 = vpop.f32.mrf.mxu0
  %v303 = vadd.f32 %v254, %v302
  %304 = vmatmul.bf16.gmra.mxu0 %v117
  %v305 = vpop.f32.mrf.mxu0
  %v306 = vadd.f32 %v257, %v305
  %v307 = vpop.f32.mrf.mxu0
  %v308 = vadd.f32 %v259, %v307
  %309 = vmatmul.bf16.gmra.mxu0 %v119
  %v310 = vpop.f32.mrf.mxu0
  %v311 = vadd.f32 %v262, %v310
  %v312 = vpop.f32.mrf.mxu0
  %v313 = vadd.f32 %v264, %v312
  %314 = vmatmul.bf16.gmra.mxu0 %v121
  %v315 = vpop.f32.mrf.mxu0
  %v316 = vadd.f32 %v267, %v315
  %v317 = vpop.f32.mrf.mxu0
  %v318 = vadd.f32 %v269, %v317
  %319 = vmatmul.bf16.gmra.mxu0 %v123
  %v320 = vpop.f32.mrf.mxu0
  %v321 = vadd.f32 %v272, %v320
  %v322 = vpop.f32.mrf.mxu0
  %v323 = vadd.f32 %v274, %v322
  %324 = vmatmul.bf16.gmra.mxu0 %v125
  %v325 = vpop.f32.mrf.mxu0
  %v326 = vadd.f32 %v277, %v325
  %v327 = vpop.f32.mrf.mxu0
  %v328 = vadd.f32 %v279, %v327
  %329 = vmatmul.bf16.gmra.mxu0 %v127
  %v330 = vpop.f32.mrf.mxu0
  %v331 = vadd.f32 %v282, %v330
  %v332 = vpop.f32.mrf.mxu0
  %v333 = vadd.f32 %v284, %v332
  %334 = vmatmul.bf16.gmra.mxu0 %v129
  %v335 = vpop.f32.mrf.mxu0
  %v336 = vadd.f32 %v287, %v335
  %v337 = vpop.f32.mrf.mxu0
  %v338 = vadd.f32 %v289, %v337
  %339 = vdwg.mxu0
  %340 = vst [vmem:[%s3] sm:$0xff] %v301
  %341 = vst [vmem:[%s3 + $0x8] sm:$0xff] %v303
  %342 = vst [vmem:[%s3 + $0x10] sm:$0xff] %v306
  %343 = vst [vmem:[%s3 + $0x18] sm:$0xff] %v308
  %344 = vst [vmem:[%s3 + $0x20] sm:$0xff] %v311
  %345 = vst [vmem:[%s3 + $0x28] sm:$0xff] %v313
  %346 = vst [vmem:[%s3 + $0x30] sm:$0xff] %v316
  %347 = vst [vmem:[%s3 + $0x38] sm:$0xff] %v318
  %348 = vst [vmem:[%s3 + $0x40] sm:$0xff] %v321
  %349 = vst [vmem:[%s3 + $0x48] sm:$0xff] %v323
  %350 = vst [vmem:[%s3 + $0x50] sm:$0xff] %v326
  %351 = vst [vmem:[%s3 + $0x58] sm:$0xff] %v328
  %352 = vst [vmem:[%s3 + $0x60] sm:$0xff] %v331
  %353 = vst [vmem:[%s3 + $0x68] sm:$0xff] %v333
  %354 = vst [vmem:[%s3 + $0x70] sm:$0xff] %v336
  %355 = vst [vmem:[%s3 + $0x78] sm:$0xff] %v338
  // Predicated region
  $region14: #{discriminator_dc_forward.6} parent=0 // pred_check
    _
  $region15: #{discriminator_dc_forward.6} parent=0 // pred_check_branch
    %357 = sbr.rel (0) target = $region17
  $region16: #{discriminator_dc_forward.6} parent=0 // pred_region
    _
  $region17: #{discriminator_dc_forward.6} parent=0 // pred_fallthru
    _
  // Predicated region
  $region18: #{discriminator_dc_forward.6} parent=0 // pred_check
    _
  $region19: #{discriminator_dc_forward.6} parent=0 // pred_check_branch
    %359 = sbr.rel (0) target = $region21
  $region20: #{discriminator_dc_forward.6} parent=0 // pred_region
    _
  $region21: #{discriminator_dc_forward.6} parent=0 // pred_fallthru
    _

</llo_original>
